<compile_context>
chip_gen: v7x
topology: tpu7x:2x2x1
jax: 0.10.0
libtpu: 0.0.40
codegen_flags: <defaults>
</compile_context>

<pallas_src>
import numpy as np
import jax
import jax.numpy as jnp
from jax.experimental import pallas as pl
from jax.experimental.pallas import tpu as pltpu

FEAT_REPR_DIMS = (16, 32, 8)   # feat_repr_dims -> dims = [(16, 32), (32, 8)]
N_NODES = 128
NUM_GRAPHS = 4


def _make_gnnmlp_kernel(num_layers, out_dims, c0, graphs_per_step, n_nodes,
                        f_in):
    """Fused forward for `graphs_per_step` graphs per grid step."""
    Gp, N, F0 = graphs_per_step, n_nodes, f_in
    f_out = out_dims[-1]

    def kernel(*refs):
        # refs = (a, x, wg_0, bg_0, wm_0, bm_0, ..., out)
        a_ref, x_ref = refs[0], refs[1]
        prm = refs[2:2 + 4 * num_layers]
        out_ref = refs[2 + 4 * num_layers]

        a = a_ref[...]                            # [Gp, N, N] (bf16 or f32)
        x = x_ref[...].reshape(Gp * N, F0)        # fold graphs into M
        h = x
        m = x

        for l in range(num_layers):
            wg = prm[4 * l][...]                  # GraphConv weight [fin, fout]
            bg = prm[4 * l + 1][...]              # GraphConv bias   [1, fout]
            wm = prm[4 * l + 2][...]              # Linear weight    [fin, fout]
            bm = prm[4 * l + 3][...]              # Linear bias      [1, fout]
            fout = out_dims[l]

            # Dropout(p=0.0) is identity.
            # TODO(synk): dropout with p>0 (training-mode RNG) not implemented.

            # GraphConv(norm='both'):  h <- Ahat @ (h @ Wg) + bg
            tg = jnp.dot(h, wg, preferred_element_type=jnp.float32)
            tg = tg.reshape(Gp, N, fout).astype(a.dtype)   # bf16 on the MXU
            hg = jnp.einsum('gij,gjo->gio', a, tg,
                            preferred_element_type=jnp.float32)
            h = hg.reshape(Gp * N, fout) + bg

            # nn.Linear:               m <- m @ Wm + bm
            m = jnp.dot(m, wm, preferred_element_type=jnp.float32) + bm

            if l < num_layers - 1:     # ReLU between layers, none on the last
                h = jnp.maximum(h, 0.0)
                m = jnp.maximum(m, 0.0)

        # Reference: mixing_coeffs[0]*gcn + mixing_coeffs[0]*mlp
        y = (c0 * (h + m)).reshape(Gp, N, f_out)
        # Lane-dense store: write (f_out, N) = (8, 128) per graph (unmasked
        # vst) instead of (N, 8) masked partial stores; the transpose rides
        # the otherwise-idle XLU slot.  The wrapper undoes the layout.
        for g in range(Gp):
            out_ref[g] = y[g].T.astype(out_ref.dtype)

    return kernel


def gnnmlp_forward(a_norm, x, gcn_params, mlp_params, coeffs, *,
                   a_dtype=jnp.bfloat16, graphs_per_step=2):
    """a_norm: [G, N, N] f32, x: [G, N, F0] f32.

    gcn_params / mlp_params: list of (W [fin, fout], b [1, fout]) per layer.
    coeffs: mixing_coeffs buffer (only coeffs[0] is used, like the reference).
    a_dtype: dtype of A fed to the MXU. bf16 (default) is the production
             setting — native MXU dtype, halves the dominant A DMA; use f32
             for exact 1e-5 verification against the f32 reference.
    graphs_per_step: 2 halves grid-step overhead on single-TC v5e/v6e while
             keeping megacore sharding on v7x (one step per TensorCore).
    """
    G, N, _ = a_norm.shape
    F0 = x.shape[-1]
    num_layers = len(gcn_params)
    out_dims = [int(w.shape[1]) for (w, _) in gcn_params]
    f_out = out_dims[-1]

    assert G % graphs_per_step == 0
    Gp = graphs_per_step
    num_steps = G // Gp

    params = []
    for (wg, bg), (wm, bm) in zip(gcn_params, mlp_params):
        params += [wg, bg, wm, bm]

    # Non-learnable buffer -> bake in as a compile-time constant.
    # NOTE: changing mixing_coeffs forces a retrace; coeffs[1] is intentionally
    # ignored to mirror the reference module's forward.
    c0 = float(coeffs[0])

    in_specs = [
        pl.BlockSpec((Gp, N, N), lambda s: (s, 0, 0)),    # per-step A tiles
        pl.BlockSpec((Gp, N, F0), lambda s: (s, 0, 0)),   # per-step features
    ]
    for arr in params:                                    # weights VMEM-resident
        in_specs.append(
            pl.BlockSpec(arr.shape, lambda s, _nd=arr.ndim: (0,) * _nd))

    out_t = pl.pallas_call(
        _make_gnnmlp_kernel(num_layers, out_dims, c0, Gp, N, F0),
        out_shape=jax.ShapeDtypeStruct((G, f_out, N), jnp.float32),
        grid=(num_steps,),
        in_specs=in_specs,
        out_specs=pl.BlockSpec((Gp, f_out, N), lambda s: (s, 0, 0)),
        compiler_params=pltpu.CompilerParams(
            dimension_semantics=("parallel",)),           # 2nd TC on v7x
    )(a_norm.astype(a_dtype), x, *params)

    # Undo the lane-dense (f_out, N) store layout -> (N, f_out).
    return jnp.swapaxes(out_t, 1, 2)


def gnnmlp_reference(a_norm, x, gcn_params, mlp_params, coeffs):
    """Pure-JAX (unfused) reference for correctness checking."""
    num_layers = len(gcn_params)
    h = x
    for l, (w, b) in enumerate(gcn_params):
        h = jnp.einsum('gij,gjk->gik', a_norm, h @ w) + b
        if l < num_layers - 1:
            h = jnp.maximum(h, 0.0)
    m = x
    for l, (w, b) in enumerate(mlp_params):
        m = m @ w + b
        if l < num_layers - 1:
            m = jnp.maximum(m, 0.0)
    return coeffs[0] * h + coeffs[0] * m


def _init_params(key, dims):
    """Deterministic synthetic init (shapes follow GraphConv / nn.Linear)."""
    gcn_params, mlp_params = [], []
    for (fin, fout) in dims:
        key, k1, k2 = jax.random.split(key, 3)
        scale = 1.0 / np.sqrt(fin)
        gcn_params.append((
            jax.random.normal(k1, (fin, fout), jnp.float32) * scale,
            jnp.zeros((1, fout), jnp.float32),
        ))
        mlp_params.append((
            jax.random.normal(k2, (fin, fout), jnp.float32) * scale,
            jax.random.normal(jax.random.fold_in(k2, 1), (1, fout),
                              jnp.float32) * scale,
        ))
    return gcn_params, mlp_params


if __name__ == "__main__":
    key = jax.random.PRNGKey(0)
    k_adj, k_feat, k_par = jax.random.split(key, 3)

    G, N = NUM_GRAPHS, N_NODES

    # Batch of G random undirected graphs with self-loops, as dense
    # symmetric-normalized adjacencies (DGL GraphConv norm='both' equivalent).
    adj = jax.random.bernoulli(k_adj, 0.1, (G, N, N))
    adj = jnp.logical_or(adj, jnp.swapaxes(adj, 1, 2))
    adj = jnp.logical_or(adj, jnp.eye(N, dtype=bool)[None]).astype(jnp.float32)
    deg = adj.sum(axis=2)
    d_inv_sqrt = 1.0 / jnp.sqrt(deg)
    a_norm = d_inv_sqrt[:, :, None] * adj * d_inv_sqrt[:, None, :]

    # Node features [G, N, F0]
    x = jax.random.normal(k_feat, (G, N, FEAT_REPR_DIMS[0]), jnp.float32)

    dims = list(zip(FEAT_REPR_DIMS[:-1], FEAT_REPR_DIMS[1:]))
    gcn_params, mlp_params = _init_params(k_par, dims)

    # register_buffer('mixing_coeffs', Tensor([0.5, 0.5]))
    coeffs = np.array([0.5, 0.5], dtype=np.float32)

    ref = gnnmlp_reference(a_norm, x, gcn_params, mlp_params, coeffs)

    # 1) Exact verification build (f32 A on the MXU): must match at 1e-5.
    out_f32 = gnnmlp_forward(a_norm, x, gcn_params, mlp_params, coeffs,
                             a_dtype=jnp.float32)
    out_f32 = jax.block_until_ready(out_f32)
    np.testing.assert_allclose(np.asarray(out_f32), np.asarray(ref),
                               rtol=1e-5, atol=1e-5)

    # 2) Production build (bf16 A on the MXU, f32 accumulate): tolerance gated
    #    on a_dtype per bf16 rounding of the Ahat aggregation.
    out_bf16 = gnnmlp_forward(a_norm, x, gcn_params, mlp_params, coeffs)
    out_bf16 = jax.block_until_ready(out_bf16)
    np.testing.assert_allclose(np.asarray(out_bf16), np.asarray(ref),
                               rtol=3e-2, atol=3e-2)

    # TODO(synk): dropout with p>0 (training-mode RNG), the SAGEConv/GATConv
    # stack variants, top_is_proj=True and PReLU are not implemented (defaults:
    # GraphConv, ReLU, dropout=0.0, top_is_proj=False).
    print("KERNEL_OK")
</pallas_src>

<mosaic_0001>
module attributes {stable_mosaic.version = 11 : i64} {
  func.func @kernel(%arg0: i32, %arg1: memref<2x128x128xf32, #tpu.memory_space<vmem>>, %arg2: memref<2x128x16xf32, #tpu.memory_space<vmem>>, %arg3: memref<16x32xf32, #tpu.memory_space<vmem>>, %arg4: memref<1x32xf32, #tpu.memory_space<vmem>>, %arg5: memref<16x32xf32, #tpu.memory_space<vmem>>, %arg6: memref<1x32xf32, #tpu.memory_space<vmem>>, %arg7: memref<32x8xf32, #tpu.memory_space<vmem>>, %arg8: memref<1x8xf32, #tpu.memory_space<vmem>>, %arg9: memref<32x8xf32, #tpu.memory_space<vmem>>, %arg10: memref<1x8xf32, #tpu.memory_space<vmem>>, %arg11: memref<2x8x128xf32, #tpu.memory_space<vmem>>) attributes {dimension_semantics = [#tpu.dimension_semantics<parallel>], iteration_bounds = array<i64: 2>, scalar_prefetch = 0 : i64, scratch_operands = 0 : i64, tpu.core_type = #tpu.core_type<tc>, window_params = [{transform_indices = @transform_0, window_bounds = array<i64: 2, 128, 128>}, {transform_indices = @transform_1, window_bounds = array<i64: 2, 128, 16>}, {pipeline_mode = #tpu.pipeline_mode<synchronous>, transform_indices = @transform_2, window_bounds = array<i64: 16, 32>}, {pipeline_mode = #tpu.pipeline_mode<synchronous>, transform_indices = @transform_3, window_bounds = array<i64: 1, 32>}, {pipeline_mode = #tpu.pipeline_mode<synchronous>, transform_indices = @transform_4, window_bounds = array<i64: 16, 32>}, {pipeline_mode = #tpu.pipeline_mode<synchronous>, transform_indices = @transform_5, window_bounds = array<i64: 1, 32>}, {pipeline_mode = #tpu.pipeline_mode<synchronous>, transform_indices = @transform_6, window_bounds = array<i64: 32, 8>}, {pipeline_mode = #tpu.pipeline_mode<synchronous>, transform_indices = @transform_7, window_bounds = array<i64: 1, 8>}, {pipeline_mode = #tpu.pipeline_mode<synchronous>, transform_indices = @transform_8, window_bounds = array<i64: 32, 8>}, {pipeline_mode = #tpu.pipeline_mode<synchronous>, transform_indices = @transform_9, window_bounds = array<i64: 1, 8>}, {transform_indices = @transform_10, window_bounds = array<i64: 2, 8, 128>}]} {
    %c0 = arith.constant 0 : index
    %c0_0 = arith.constant 0 : index
    %c0_1 = arith.constant 0 : index
    %0 = vector.load %arg1[%c0, %c0_0, %c0_1] : memref<2x128x128xf32, #tpu.memory_space<vmem>>, vector<2x128x128xf32>
    %c0_2 = arith.constant 0 : index
    %c0_3 = arith.constant 0 : index
    %c0_4 = arith.constant 0 : index
    %1 = vector.load %arg2[%c0_2, %c0_3, %c0_4] : memref<2x128x16xf32, #tpu.memory_space<vmem>>, vector<2x128x16xf32>
    %2 = vector.shape_cast %1 : vector<2x128x16xf32> to vector<256x16xf32>
    %c0_5 = arith.constant 0 : index
    %c0_6 = arith.constant 0 : index
    %3 = vector.load %arg3[%c0_5, %c0_6] : memref<16x32xf32, #tpu.memory_space<vmem>>, vector<16x32xf32>
    %c0_7 = arith.constant 0 : index
    %c0_8 = arith.constant 0 : index
    %4 = vector.load %arg4[%c0_7, %c0_8] : memref<1x32xf32, #tpu.memory_space<vmem>>, vector<1x32xf32>
    %c0_9 = arith.constant 0 : index
    %c0_10 = arith.constant 0 : index
    %5 = vector.load %arg5[%c0_9, %c0_10] : memref<16x32xf32, #tpu.memory_space<vmem>>, vector<16x32xf32>
    %c0_11 = arith.constant 0 : index
    %c0_12 = arith.constant 0 : index
    %6 = vector.load %arg6[%c0_11, %c0_12] : memref<1x32xf32, #tpu.memory_space<vmem>>, vector<1x32xf32>
    %cst = arith.constant dense<0.000000e+00> : vector<256x32xf32>
    %7 = tpu.matmul %2, %3, %cst {dimension_numbers = #tpu.dot_dimension_numbers<[1], [0], [0], [1], [0, 0, 1, 1], [], []>} : vector<256x16xf32>, vector<16x32xf32>, vector<256x32xf32> -> vector<256x32xf32>
    %8 = vector.shape_cast %7 : vector<256x32xf32> to vector<2x128x32xf32>
    "tpu.trace_start"() <{level = 10 : i32, message = "gij,gjo->gio"}> : () -> ()
    %cst_13 = arith.constant dense<0.000000e+00> : vector<2x128x32xf32>
    %9 = tpu.matmul %0, %8, %cst_13 {dimension_numbers = #tpu.dot_dimension_numbers<[2], [1], [1], [2], [0, 0, 0, 1, 1, 2], [0], [0]>} : vector<2x128x128xf32>, vector<2x128x32xf32>, vector<2x128x32xf32> -> vector<2x128x32xf32>
    "tpu.trace_stop"() : () -> ()
    %10 = vector.shape_cast %9 : vector<2x128x32xf32> to vector<256x32xf32>
    %11 = vector.broadcast %4 : vector<1x32xf32> to vector<256x32xf32>
    %12 = arith.addf %10, %11 : vector<256x32xf32>
    %cst_14 = arith.constant dense<0.000000e+00> : vector<256x32xf32>
    %13 = tpu.matmul %2, %5, %cst_14 {dimension_numbers = #tpu.dot_dimension_numbers<[1], [0], [0], [1], [0, 0, 1, 1], [], []>} : vector<256x16xf32>, vector<16x32xf32>, vector<256x32xf32> -> vector<256x32xf32>
    %14 = vector.broadcast %6 : vector<1x32xf32> to vector<256x32xf32>
    %15 = arith.addf %13, %14 : vector<256x32xf32>
    %cst_15 = arith.constant 0.000000e+00 : f32
    %16 = vector.broadcast %cst_15 : f32 to vector<256x32xf32>
    %17 = arith.maximumf %12, %16 : vector<256x32xf32>
    %cst_16 = arith.constant 0.000000e+00 : f32
    %18 = vector.broadcast %cst_16 : f32 to vector<256x32xf32>
    %19 = arith.maximumf %15, %18 : vector<256x32xf32>
    %c0_17 = arith.constant 0 : index
    %c0_18 = arith.constant 0 : index
    %20 = vector.load %arg7[%c0_17, %c0_18] : memref<32x8xf32, #tpu.memory_space<vmem>>, vector<32x8xf32>
    %c0_19 = arith.constant 0 : index
    %c0_20 = arith.constant 0 : index
    %21 = vector.load %arg8[%c0_19, %c0_20] : memref<1x8xf32, #tpu.memory_space<vmem>>, vector<1x8xf32>
    %c0_21 = arith.constant 0 : index
    %c0_22 = arith.constant 0 : index
    %22 = vector.load %arg9[%c0_21, %c0_22] : memref<32x8xf32, #tpu.memory_space<vmem>>, vector<32x8xf32>
    %c0_23 = arith.constant 0 : index
    %c0_24 = arith.constant 0 : index
    %23 = vector.load %arg10[%c0_23, %c0_24] : memref<1x8xf32, #tpu.memory_space<vmem>>, vector<1x8xf32>
    %cst_25 = arith.constant dense<0.000000e+00> : vector<256x8xf32>
    %24 = tpu.matmul %17, %20, %cst_25 {dimension_numbers = #tpu.dot_dimension_numbers<[1], [0], [0], [1], [0, 0, 1, 1], [], []>} : vector<256x32xf32>, vector<32x8xf32>, vector<256x8xf32> -> vector<256x8xf32>
    %25 = vector.shape_cast %24 : vector<256x8xf32> to vector<2x128x8xf32>
    "tpu.trace_start"() <{level = 10 : i32, message = "gij,gjo->gio"}> : () -> ()
    %cst_26 = arith.constant dense<0.000000e+00> : vector<2x128x8xf32>
    %26 = tpu.matmul %0, %25, %cst_26 {dimension_numbers = #tpu.dot_dimension_numbers<[2], [1], [1], [2], [0, 0, 0, 1, 1, 2], [0], [0]>} : vector<2x128x128xf32>, vector<2x128x8xf32>, vector<2x128x8xf32> -> vector<2x128x8xf32>
    "tpu.trace_stop"() : () -> ()
    %27 = vector.shape_cast %26 : vector<2x128x8xf32> to vector<256x8xf32>
    %28 = vector.broadcast %21 : vector<1x8xf32> to vector<256x8xf32>
    %29 = arith.addf %27, %28 : vector<256x8xf32>
    %cst_27 = arith.constant dense<0.000000e+00> : vector<256x8xf32>
    %30 = tpu.matmul %19, %22, %cst_27 {dimension_numbers = #tpu.dot_dimension_numbers<[1], [0], [0], [1], [0, 0, 1, 1], [], []>} : vector<256x32xf32>, vector<32x8xf32>, vector<256x8xf32> -> vector<256x8xf32>
    %31 = vector.broadcast %23 : vector<1x8xf32> to vector<256x8xf32>
    %32 = arith.addf %30, %31 : vector<256x8xf32>
    %33 = arith.addf %29, %32 : vector<256x8xf32>
    %cst_28 = arith.constant 5.000000e-01 : f32
    %34 = vector.broadcast %cst_28 : f32 to vector<256x8xf32>
    %35 = arith.mulf %34, %33 : vector<256x8xf32>
    %36 = vector.shape_cast %35 : vector<256x8xf32> to vector<2x128x8xf32>
    %37 = vector.extract_strided_slice %36 {offsets = [0, 0, 0], sizes = [1, 128, 8], strides = [1, 1, 1]} : vector<2x128x8xf32> to vector<1x128x8xf32>
    %38 = vector.shape_cast %37 : vector<1x128x8xf32> to vector<128x8xf32>
    %39 = tpu.transpose %38, [1, 0] : vector<128x8xf32> -> vector<8x128xf32>
    %c0_29 = arith.constant 0 : index
    %c0_30 = arith.constant 0 : index
    %c0_31 = arith.constant 0 : index
    %40 = vector.load %arg11[%c0_29, %c0_30, %c0_31] : memref<2x8x128xf32, #tpu.memory_space<vmem>>, vector<1x8x128xf32>
    %41 = vector.shape_cast %40 : vector<1x8x128xf32> to vector<8x128xf32>
    %42 = vector.shape_cast %39 : vector<8x128xf32> to vector<1x8x128xf32>
    tpu.vector_store %arg11[%c0_29, %c0_30, %c0_31], %42 {strides = array<i32>} : memref<2x8x128xf32, #tpu.memory_space<vmem>>, vector<1x8x128xf32>,
    %43 = vector.extract_strided_slice %36 {offsets = [1, 0, 0], sizes = [1, 128, 8], strides = [1, 1, 1]} : vector<2x128x8xf32> to vector<1x128x8xf32>
    %44 = vector.shape_cast %43 : vector<1x128x8xf32> to vector<128x8xf32>
    %45 = tpu.transpose %44, [1, 0] : vector<128x8xf32> -> vector<8x128xf32>
    %c1 = arith.constant 1 : index
    %c0_32 = arith.constant 0 : index
    %c0_33 = arith.constant 0 : index
    %46 = vector.load %arg11[%c1, %c0_32, %c0_33] : memref<2x8x128xf32, #tpu.memory_space<vmem>>, vector<1x8x128xf32>
    %47 = vector.shape_cast %46 : vector<1x8x128xf32> to vector<8x128xf32>
    %48 = vector.shape_cast %45 : vector<8x128xf32> to vector<1x8x128xf32>
    tpu.vector_store %arg11[%c1, %c0_32, %c0_33], %48 {strides = array<i32>} : memref<2x8x128xf32, #tpu.memory_space<vmem>>, vector<1x8x128xf32>,
    return
  }
  func.func @transform_0(%arg0: i32) -> (i32, i32, i32) {
    %c0_i32 = arith.constant 0 : i32
    %c0_i32_0 = arith.constant 0 : i32
    %c0_i32_1 = arith.constant 0 : i32
    return %arg0, %c0_i32, %c0_i32_0 : i32, i32, i32
  }
  func.func @transform_1(%arg0: i32) -> (i32, i32, i32) {
    %c0_i32 = arith.constant 0 : i32
    %c0_i32_0 = arith.constant 0 : i32
    %c0_i32_1 = arith.constant 0 : i32
    return %arg0, %c0_i32, %c0_i32_0 : i32, i32, i32
  }
  func.func @transform_2(%arg0: i32) -> (i32, i32) {
    %c0_i32 = arith.constant 0 : i32
    %c0_i32_0 = arith.constant 0 : i32
    %c0_i32_1 = arith.constant 0 : i32
    return %c0_i32, %c0_i32_0 : i32, i32
  }
  func.func @transform_3(%arg0: i32) -> (i32, i32) {
    %c0_i32 = arith.constant 0 : i32
    %c0_i32_0 = arith.constant 0 : i32
    %c0_i32_1 = arith.constant 0 : i32
    return %c0_i32, %c0_i32_0 : i32, i32
  }
  func.func @transform_4(%arg0: i32) -> (i32, i32) {
    %c0_i32 = arith.constant 0 : i32
    %c0_i32_0 = arith.constant 0 : i32
    %c0_i32_1 = arith.constant 0 : i32
    return %c0_i32, %c0_i32_0 : i32, i32
  }
  func.func @transform_5(%arg0: i32) -> (i32, i32) {
    %c0_i32 = arith.constant 0 : i32
    %c0_i32_0 = arith.constant 0 : i32
    %c0_i32_1 = arith.constant 0 : i32
    return %c0_i32, %c0_i32_0 : i32, i32
  }
  func.func @transform_6(%arg0: i32) -> (i32, i32) {
    %c0_i32 = arith.constant 0 : i32
    %c0_i32_0 = arith.constant 0 : i32
    %c0_i32_1 = arith.constant 0 : i32
    return %c0_i32, %c0_i32_0 : i32, i32
  }
  func.func @transform_7(%arg0: i32) -> (i32, i32) {
    %c0_i32 = arith.constant 0 : i32
    %c0_i32_0 = arith.constant 0 : i32
    %c0_i32_1 = arith.constant 0 : i32
    return %c0_i32, %c0_i32_0 : i32, i32
  }
  func.func @transform_8(%arg0: i32) -> (i32, i32) {
    %c0_i32 = arith.constant 0 : i32
    %c0_i32_0 = arith.constant 0 : i32
    %c0_i32_1 = arith.constant 0 : i32
    return %c0_i32, %c0_i32_0 : i32, i32
  }
  func.func @transform_9(%arg0: i32) -> (i32, i32) {
    %c0_i32 = arith.constant 0 : i32
    %c0_i32_0 = arith.constant 0 : i32
    %c0_i32_1 = arith.constant 0 : i32
    return %c0_i32, %c0_i32_0 : i32, i32
  }
  func.func @transform_10(%arg0: i32) -> (i32, i32, i32) {
    %c0_i32 = arith.constant 0 : i32
    %c0_i32_0 = arith.constant 0 : i32
    %c0_i32_1 = arith.constant 0 : i32
    return %arg0, %c0_i32, %c0_i32_0 : i32, i32, i32
  }
}

</mosaic_0001>

<llo_original>
// kernel: tpu_custom_call.1
$region0: #{tpu_custom_call.1}
  #allocation0 [shape = 'u32[]', space=smem, size = 0x4, offset = 0x4, fixed_abs, tag = 'smem constant byte address 0x4 - core index']
  #allocation1 [shape = 'u32[144,128]{1,0:T(1,128)}', space=vmem, size = 0x12000, scoped, tag = 'internal scratch']
  %s0 = inlined_call_operand.vmem [shape: f32[4,128,128], index: 0, kind: input, shape index: {}]
  %s1 = inlined_call_operand.vmem [shape: f32[4,128,16], index: 1, kind: input, shape index: {}]
  %s2 = inlined_call_operand.vmem [shape: f32[16,32], index: 2, kind: input, shape index: {}]
  %s3 = inlined_call_operand.vmem [shape: f32[1,32], index: 3, kind: input, shape index: {}]
  %s4 = inlined_call_operand.vmem [shape: f32[16,32], index: 4, kind: input, shape index: {}]
  %s5 = inlined_call_operand.vmem [shape: f32[1,32], index: 5, kind: input, shape index: {}]
  %s6 = inlined_call_operand.vmem [shape: f32[32,8], index: 6, kind: input, shape index: {}]
  %s7 = inlined_call_operand.vmem [shape: f32[1,8], index: 7, kind: input, shape index: {}]
  %s8 = inlined_call_operand.vmem [shape: f32[32,8], index: 8, kind: input, shape index: {}]
  %s9 = inlined_call_operand.vmem [shape: f32[1,8], index: 9, kind: input, shape index: {}]
  %s10 = inlined_call_operand.hbm [shape: f32[4,8,128], index: 10, kind: output, shape index: {}]
  %s11 = sld [smem:[#allocation0]]
  $region73: #{tpu_custom_call.1} parent=0
    _
  %s13 = ssub.s32 1, %s11
  %s14 = scalar_select 0, %s13, %s11
  $region1: #{tpu_custom_call.1} parent=0
    #allocation2 [shape = 'u8[16384]{0}', space=vmem, size = 0x4000, scoped, tag = 'output window, operand 0']
    #allocation3 [shape = 's32[2]{0}', space=sflag, size = 0x8, scoped, tag = 'scoped memory for tpu_custom_call.1']
    %15 = vsyncpa [#allocation3], 0
    %s16 = scalar_lea.sflag [#allocation3], 1
    %17 = vsyncpa %s16, 0
    loop: start=0, step=1, limit=4
    $region2: #{tpu_custom_call.1} parent=1 // loop_pre_header
      _
    $region3: #{tpu_custom_call.1} parent=1 // loop_header
      %s19 = sphi 0, %s23
      %p20 = scmp.ge.s32.totalorder %s19, 4
      %s29 = sphi 0, %s31
      %s32 = sphi 0, %s29
      %s33 = sphi 0, %s32
      %s49 = sphi 0, %s33
      %s55 = sphi 0, %s57
      %s58 = sphi 0, %s55
      %s59 = sphi 0, %s58
      %s75 = sphi 0, %s59
      %s79 = sphi 0, %s79
      %s81 = sphi 0, %s79
      %s82 = sphi 0, %s81
      %s96 = sphi 0, %s82
      %s100 = sphi 0, %s100
      %s102 = sphi 0, %s100
      %s103 = sphi 0, %s102
      %s117 = sphi 0, %s103
      %s121 = sphi 0, %s121
      %s123 = sphi 0, %s121
      %s124 = sphi 0, %s123
      %s138 = sphi 0, %s124
      %s142 = sphi 0, %s142
      %s144 = sphi 0, %s142
      %s145 = sphi 0, %s144
      %s159 = sphi 0, %s145
      %s163 = sphi 0, %s163
      %s165 = sphi 0, %s163
      %s166 = sphi 0, %s165
      %s180 = sphi 0, %s166
      %s184 = sphi 0, %s184
      %s186 = sphi 0, %s184
      %s187 = sphi 0, %s186
      %s201 = sphi 0, %s187
      %s205 = sphi 0, %s205
      %s207 = sphi 0, %s205
      %s208 = sphi 0, %s207
      %s222 = sphi 0, %s208
      %s226 = sphi 0, %s226
      %s228 = sphi 0, %s226
      %s229 = sphi 0, %s228
      %s243 = sphi 0, %s229
      %s249 = sphi 0, %s251
      %s252 = sphi 0, %s249
      %s253 = sphi 0, %s252
      %s269 = sphi 0, %s253
    $region4: #{tpu_custom_call.1} parent=1 // loop_header_branch
      %22 = sbr.rel (%p20) target = $region8
    $region5: #{tpu_custom_call.1} parent=1 // loop_body
      %s24 = ssub.s32 %s19, 1
      %s25 = ssub.s32 %s19, 2
      %s26 = sadd.s32 %s19, 1
      %s27 = ssub.s32 %s19, %s26
      %p28 = scmp.eq.s32.totalorder %s27, 0
      %s30 = sadd.s32 %s29, 1
      %s31 = scalar_select %p28, %s29, %s30
      %p34 = pneg %p28
      %p35 = scmp.eq.s32.totalorder %s19, 1
      %p36 = por %p34, %p35
      %p37 = scmp.ne.s32.totalorder %s29, %s32
      %p38 = scmp.eq.s32.totalorder %s19, 0
      %p39 = por %p37, %p38
      %p40 = scmp.ne.s32.totalorder %s29, %s32
      %p41 = scmp.eq.s32.totalorder %s24, 1
      %p42 = por %p40, %p41
      %p43 = scmp.ne.s32.totalorder %s32, %s33
      %p44 = scmp.eq.s32.totalorder %s24, 0
      %p45 = por %p43, %p44
      %p46 = scmp.ne.s32.totalorder %s32, %s33
      %p47 = scmp.eq.s32.totalorder %s25, 1
      %p48 = por %p46, %p47
      %p50 = scmp.ne.s32.totalorder %s33, %s49
      %p51 = scmp.eq.s32.totalorder %s25, 0
      %p52 = por %p50, %p51
      %s53 = ssub.s32 %s19, %s26
      %p54 = scmp.eq.s32.totalorder %s53, 0
      %s56 = sadd.s32 %s55, 1
      %s57 = scalar_select %p54, %s55, %s56
      %p60 = pneg %p54
      %p61 = scmp.eq.s32.totalorder %s19, 1
      %p62 = por %p60, %p61
      %p63 = scmp.ne.s32.totalorder %s55, %s58
      %p64 = scmp.eq.s32.totalorder %s19, 0
      %p65 = por %p63, %p64
      %p66 = scmp.ne.s32.totalorder %s55, %s58
      %p67 = scmp.eq.s32.totalorder %s24, 1
      %p68 = por %p66, %p67
      %p69 = scmp.ne.s32.totalorder %s58, %s59
      %p70 = scmp.eq.s32.totalorder %s24, 0
      %p71 = por %p69, %p70
      %p72 = scmp.ne.s32.totalorder %s58, %s59
      %p73 = scmp.eq.s32.totalorder %s25, 1
      %p74 = por %p72, %p73
      %p76 = scmp.ne.s32.totalorder %s59, %s75
      %p77 = scmp.eq.s32.totalorder %s25, 0
      %p78 = por %p76, %p77
      %s80 = sadd.s32 %s79, 1
      %p83 = scmp.eq.s32.totalorder %s19, 1
      %p84 = scmp.ne.s32.totalorder %s79, %s81
      %p85 = scmp.eq.s32.totalorder %s19, 0
      %p86 = por %p84, %p85
      %p87 = scmp.ne.s32.totalorder %s79, %s81
      %p88 = scmp.eq.s32.totalorder %s24, 1
      %p89 = por %p87, %p88
      %p90 = scmp.ne.s32.totalorder %s81, %s82
      %p91 = scmp.eq.s32.totalorder %s24, 0
      %p92 = por %p90, %p91
      %p93 = scmp.ne.s32.totalorder %s81, %s82
      %p94 = scmp.eq.s32.totalorder %s25, 1
      %p95 = por %p93, %p94
      %p97 = scmp.ne.s32.totalorder %s82, %s96
      %p98 = scmp.eq.s32.totalorder %s25, 0
      %p99 = por %p97, %p98
      %s101 = sadd.s32 %s100, 1
      %p104 = scmp.eq.s32.totalorder %s19, 1
      %p105 = scmp.ne.s32.totalorder %s100, %s102
      %p106 = scmp.eq.s32.totalorder %s19, 0
      %p107 = por %p105, %p106
      %p108 = scmp.ne.s32.totalorder %s100, %s102
      %p109 = scmp.eq.s32.totalorder %s24, 1
      %p110 = por %p108, %p109
      %p111 = scmp.ne.s32.totalorder %s102, %s103
      %p112 = scmp.eq.s32.totalorder %s24, 0
      %p113 = por %p111, %p112
      %p114 = scmp.ne.s32.totalorder %s102, %s103
      %p115 = scmp.eq.s32.totalorder %s25, 1
      %p116 = por %p114, %p115
      %p118 = scmp.ne.s32.totalorder %s103, %s117
      %p119 = scmp.eq.s32.totalorder %s25, 0
      %p120 = por %p118, %p119
      %s122 = sadd.s32 %s121, 1
      %p125 = scmp.eq.s32.totalorder %s19, 1
      %p126 = scmp.ne.s32.totalorder %s121, %s123
      %p127 = scmp.eq.s32.totalorder %s19, 0
      %p128 = por %p126, %p127
      %p129 = scmp.ne.s32.totalorder %s121, %s123
      %p130 = scmp.eq.s32.totalorder %s24, 1
      %p131 = por %p129, %p130
      %p132 = scmp.ne.s32.totalorder %s123, %s124
      %p133 = scmp.eq.s32.totalorder %s24, 0
      %p134 = por %p132, %p133
      %p135 = scmp.ne.s32.totalorder %s123, %s124
      %p136 = scmp.eq.s32.totalorder %s25, 1
      %p137 = por %p135, %p136
      %p139 = scmp.ne.s32.totalorder %s124, %s138
      %p140 = scmp.eq.s32.totalorder %s25, 0
      %p141 = por %p139, %p140
      %s143 = sadd.s32 %s142, 1
      %p146 = scmp.eq.s32.totalorder %s19, 1
      %p147 = scmp.ne.s32.totalorder %s142, %s144
      %p148 = scmp.eq.s32.totalorder %s19, 0
      %p149 = por %p147, %p148
      %p150 = scmp.ne.s32.totalorder %s142, %s144
      %p151 = scmp.eq.s32.totalorder %s24, 1
      %p152 = por %p150, %p151
      %p153 = scmp.ne.s32.totalorder %s144, %s145
      %p154 = scmp.eq.s32.totalorder %s24, 0
      %p155 = por %p153, %p154
      %p156 = scmp.ne.s32.totalorder %s144, %s145
      %p157 = scmp.eq.s32.totalorder %s25, 1
      %p158 = por %p156, %p157
      %p160 = scmp.ne.s32.totalorder %s145, %s159
      %p161 = scmp.eq.s32.totalorder %s25, 0
      %p162 = por %p160, %p161
      %s164 = sadd.s32 %s163, 1
      %p167 = scmp.eq.s32.totalorder %s19, 1
      %p168 = scmp.ne.s32.totalorder %s163, %s165
      %p169 = scmp.eq.s32.totalorder %s19, 0
      %p170 = por %p168, %p169
      %p171 = scmp.ne.s32.totalorder %s163, %s165
      %p172 = scmp.eq.s32.totalorder %s24, 1
      %p173 = por %p171, %p172
      %p174 = scmp.ne.s32.totalorder %s165, %s166
      %p175 = scmp.eq.s32.totalorder %s24, 0
      %p176 = por %p174, %p175
      %p177 = scmp.ne.s32.totalorder %s165, %s166
      %p178 = scmp.eq.s32.totalorder %s25, 1
      %p179 = por %p177, %p178
      %p181 = scmp.ne.s32.totalorder %s166, %s180
      %p182 = scmp.eq.s32.totalorder %s25, 0
      %p183 = por %p181, %p182
      %s185 = sadd.s32 %s184, 1
      %p188 = scmp.eq.s32.totalorder %s19, 1
      %p189 = scmp.ne.s32.totalorder %s184, %s186
      %p190 = scmp.eq.s32.totalorder %s19, 0
      %p191 = por %p189, %p190
      %p192 = scmp.ne.s32.totalorder %s184, %s186
      %p193 = scmp.eq.s32.totalorder %s24, 1
      %p194 = por %p192, %p193
      %p195 = scmp.ne.s32.totalorder %s186, %s187
      %p196 = scmp.eq.s32.totalorder %s24, 0
      %p197 = por %p195, %p196
      %p198 = scmp.ne.s32.totalorder %s186, %s187
      %p199 = scmp.eq.s32.totalorder %s25, 1
      %p200 = por %p198, %p199
      %p202 = scmp.ne.s32.totalorder %s187, %s201
      %p203 = scmp.eq.s32.totalorder %s25, 0
      %p204 = por %p202, %p203
      %s206 = sadd.s32 %s205, 1
      %p209 = scmp.eq.s32.totalorder %s19, 1
      %p210 = scmp.ne.s32.totalorder %s205, %s207
      %p211 = scmp.eq.s32.totalorder %s19, 0
      %p212 = por %p210, %p211
      %p213 = scmp.ne.s32.totalorder %s205, %s207
      %p214 = scmp.eq.s32.totalorder %s24, 1
      %p215 = por %p213, %p214
      %p216 = scmp.ne.s32.totalorder %s207, %s208
      %p217 = scmp.eq.s32.totalorder %s24, 0
      %p218 = por %p216, %p217
      %p219 = scmp.ne.s32.totalorder %s207, %s208
      %p220 = scmp.eq.s32.totalorder %s25, 1
      %p221 = por %p219, %p220
      %p223 = scmp.ne.s32.totalorder %s208, %s222
      %p224 = scmp.eq.s32.totalorder %s25, 0
      %p225 = por %p223, %p224
      %s227 = sadd.s32 %s226, 1
      %p230 = scmp.eq.s32.totalorder %s19, 1
      %p231 = scmp.ne.s32.totalorder %s226, %s228
      %p232 = scmp.eq.s32.totalorder %s19, 0
      %p233 = por %p231, %p232
      %p234 = scmp.ne.s32.totalorder %s226, %s228
      %p235 = scmp.eq.s32.totalorder %s24, 1
      %p236 = por %p234, %p235
      %p237 = scmp.ne.s32.totalorder %s228, %s229
      %p238 = scmp.eq.s32.totalorder %s24, 0
      %p239 = por %p237, %p238
      %p240 = scmp.ne.s32.totalorder %s228, %s229
      %p241 = scmp.eq.s32.totalorder %s25, 1
      %p242 = por %p240, %p241
      %p244 = scmp.ne.s32.totalorder %s229, %s243
      %p245 = scmp.eq.s32.totalorder %s25, 0
      %p246 = por %p244, %p245
      %s247 = ssub.s32 %s19, %s26
      %p248 = scmp.eq.s32.totalorder %s247, 0
      %s250 = sadd.s32 %s249, 1
      %s251 = scalar_select %p248, %s249, %s250
      %p254 = pneg %p248
      %p255 = scmp.eq.s32.totalorder %s19, 1
      %p256 = por %p254, %p255
      %p257 = scmp.ne.s32.totalorder %s249, %s252
      %p258 = scmp.eq.s32.totalorder %s19, 0
      %p259 = por %p257, %p258
      %p260 = scmp.ne.s32.totalorder %s249, %s252
      %p261 = scmp.eq.s32.totalorder %s24, 1
      %p262 = por %p260, %p261
      %p263 = scmp.ne.s32.totalorder %s252, %s253
      %p264 = scmp.eq.s32.totalorder %s24, 0
      %p265 = por %p263, %p264
      %p266 = scmp.ne.s32.totalorder %s252, %s253
      %p267 = scmp.eq.s32.totalorder %s25, 1
      %p268 = por %p266, %p267
      %p270 = scmp.ne.s32.totalorder %s253, %s269
      %p271 = scmp.eq.s32.totalorder %s25, 0
      %p272 = por %p270, %p271
      %p273 = scmp.le.s32.totalorder 1, %s19
      %p274 = scmp.lt.s32.totalorder %s19, 3
      %p275 = pnand %p273, %p274
      %p276 = pneg %p275
      // Predicated region
      $region9: #{tpu_custom_call.1} parent=5 // pred_check
        _
      $region10: #{tpu_custom_call.1} parent=5 // pred_check_branch
        %278 = sbr.rel (%p275) target = $region12
      $region11: #{tpu_custom_call.1} parent=5 // pred_region
        %s279 = ssub.s32 %s19, 1
        // Predicated region
        $region13: #{tpu_custom_call.1} parent=11 // pred_check
          %p280 = pneg %p92
        $region14: #{tpu_custom_call.1} parent=11 // pred_check_branch
          %282 = sbr.rel (%p280) target = $region16
        $region15: #{tpu_custom_call.1} parent=11 // pred_region
          _
        $region16: #{tpu_custom_call.1} parent=11 // pred_fallthru
          _
        // Predicated region
        $region17: #{tpu_custom_call.1} parent=11 // pred_check
          %p283 = pneg %p113
        $region18: #{tpu_custom_call.1} parent=11 // pred_check_branch
          %285 = sbr.rel (%p283) target = $region20
        $region19: #{tpu_custom_call.1} parent=11 // pred_region
          _
        $region20: #{tpu_custom_call.1} parent=11 // pred_fallthru
          _
        // Predicated region
        $region21: #{tpu_custom_call.1} parent=11 // pred_check
          %p286 = pneg %p134
        $region22: #{tpu_custom_call.1} parent=11 // pred_check_branch
          %288 = sbr.rel (%p286) target = $region24
        $region23: #{tpu_custom_call.1} parent=11 // pred_region
          _
        $region24: #{tpu_custom_call.1} parent=11 // pred_fallthru
          _
        // Predicated region
        $region25: #{tpu_custom_call.1} parent=11 // pred_check
          %p289 = pneg %p155
        $region26: #{tpu_custom_call.1} parent=11 // pred_check_branch
          %291 = sbr.rel (%p289) target = $region28
        $region27: #{tpu_custom_call.1} parent=11 // pred_region
          _
        $region28: #{tpu_custom_call.1} parent=11 // pred_fallthru
          _
        // Predicated region
        $region29: #{tpu_custom_call.1} parent=11 // pred_check
          %p292 = pneg %p176
        $region30: #{tpu_custom_call.1} parent=11 // pred_check_branch
          %294 = sbr.rel (%p292) target = $region32
        $region31: #{tpu_custom_call.1} parent=11 // pred_region
          _
        $region32: #{tpu_custom_call.1} parent=11 // pred_fallthru
          _
        // Predicated region
        $region33: #{tpu_custom_call.1} parent=11 // pred_check
          %p295 = pneg %p197
        $region34: #{tpu_custom_call.1} parent=11 // pred_check_branch
          %297 = sbr.rel (%p295) target = $region36
        $region35: #{tpu_custom_call.1} parent=11 // pred_region
          _
        $region36: #{tpu_custom_call.1} parent=11 // pred_fallthru
          _
        // Predicated region
        $region37: #{tpu_custom_call.1} parent=11 // pred_check
          %p298 = pneg %p218
        $region38: #{tpu_custom_call.1} parent=11 // pred_check_branch
          %300 = sbr.rel (%p298) target = $region40
        $region39: #{tpu_custom_call.1} parent=11 // pred_region
          _
        $region40: #{tpu_custom_call.1} parent=11 // pred_fallthru
          _
        // Predicated region
        $region41: #{tpu_custom_call.1} parent=11 // pred_check
          %p301 = pneg %p239
        $region42: #{tpu_custom_call.1} parent=11 // pred_check_branch
          %303 = sbr.rel (%p301) target = $region44
        $region43: #{tpu_custom_call.1} parent=11 // pred_region
          _
        $region44: #{tpu_custom_call.1} parent=11 // pred_fallthru
          _
      $region12: #{tpu_custom_call.1} parent=5 // pred_fallthru
        _
      %p304 = scmp.lt.s32.totalorder %s19, 2
      // Predicated region
      $region45: #{tpu_custom_call.1} parent=5 // pred_check
        %p305 = pneg %p304
      $region46: #{tpu_custom_call.1} parent=5 // pred_check_branch
        %307 = sbr.rel (%p305) target = $region48
      $region47: #{tpu_custom_call.1} parent=5 // pred_region
        // Predicated region
        $region49: #{tpu_custom_call.1} parent=47 // pred_check
          %p308 = pneg %p39
        $region50: #{tpu_custom_call.1} parent=47 // pred_check_branch
          %310 = sbr.rel (%p308) target = $region52
        $region51: #{tpu_custom_call.1} parent=47 // pred_region
          %s311 = smul.u32 2, %s19
          %p312 = scmp.lt.s32.totalorder %s311, 3
          %s313 = scalar_select %p312, %s311, 3
          %s314 = smul.addr %s313, 16
          %s315 = smul.addr %s314, 8
          %s316 = scalar_lea.vmem %s0, %s315
          %s317 = smul.u32 2, %s19
        $region52: #{tpu_custom_call.1} parent=47 // pred_fallthru
          _
        // Predicated region
        $region53: #{tpu_custom_call.1} parent=47 // pred_check
          %p318 = pneg %p65
        $region54: #{tpu_custom_call.1} parent=47 // pred_check_branch
          %320 = sbr.rel (%p318) target = $region56
        $region55: #{tpu_custom_call.1} parent=47 // pred_region
          %s321 = smul.u32 2, %s19
          %p322 = scmp.lt.s32.totalorder %s321, 3
          %s323 = scalar_select %p322, %s321, 3
          %s324 = smul.addr %s323, 16
          %s325 = smul.addr %s324, 8
          %s326 = scalar_lea.vmem %s1, %s325
          %s327 = smul.u32 2, %s19
        $region56: #{tpu_custom_call.1} parent=47 // pred_fallthru
          _
      $region48: #{tpu_custom_call.1} parent=5 // pred_fallthru
        _
      %p328 = scmp.le.s32.totalorder 1, %s19
      %p329 = scmp.lt.s32.totalorder %s19, 3
      %p330 = pnand %p328, %p329
      %p331 = pneg %p330
      // Predicated region
      $region57: #{tpu_custom_call.1} parent=5 // pred_check
        _
      $region58: #{tpu_custom_call.1} parent=5 // pred_check_branch
        %333 = sbr.rel (%p330) target = $region60
      $region59: #{tpu_custom_call.1} parent=5 // pred_region
        %s334 = ssub.s32 %s19, 1
        %s335 = smul.u32 2, %s24
        %p336 = scmp.lt.s32.totalorder %s335, 3
        %s337 = scalar_select %p336, %s335, 3
        %s338 = smul.addr %s337, 16
        %s339 = smul.addr %s338, 8
        %s340 = scalar_lea.vmem %s0, %s339
        %p341 = pneg %p45
        %p342 = pneg %p42
        %s343 = smul.u32 2, %s24
        %p344 = scmp.lt.s32.totalorder %s343, 3
        %s345 = scalar_select %p344, %s343, 3
        %s346 = smul.addr %s345, 16
        %s347 = smul.addr %s346, 8
        %s348 = scalar_lea.vmem %s1, %s347
        %p349 = pneg %p71
        %p350 = pneg %p68
        %p351 = pneg %p92
        %p352 = pneg %p89
        %p353 = pneg %p113
        %p354 = pneg %p110
        %p355 = pneg %p134
        %p356 = pneg %p131
        %p357 = pneg %p155
        %p358 = pneg %p152
        %p359 = pneg %p176
        %p360 = pneg %p173
        %p361 = pneg %p197
        %p362 = pneg %p194
        %p363 = pneg %p218
        %p364 = pneg %p215
        %p365 = pneg %p239
        %p366 = pneg %p236
        %p367 = pneg %p265
        %p368 = pneg %p262
        %s369 = sand.u32 %s252, 1
        %s370 = scalar_lea.sflag [#allocation3], %s369
        %s371 = sand.u32 %s252, 1
        %s372 = smul.addr %s371, 16
        %s373 = scalar_lea.vmem [#allocation2], %s372
        %s374 = smul.u32 2, %s24
        %p375 = scmp.lt.s32.totalorder %s374, 3
        %s376 = scalar_select %p375, %s374, 3
        %s377 = smul.addr %s376, 16
        %s378 = smul.addr %s377, 8
        %s379 = scalar_lea.vmem %s0, %s378
        %s380 = smul.u32 2, %s24
        %s381 = smul.u32 2, %s24
        %p382 = scmp.lt.s32.totalorder %s381, 3
        %s383 = scalar_select %p382, %s381, 3
        %s384 = smul.addr %s383, 16
        %s385 = smul.addr %s384, 8
        %s386 = scalar_lea.vmem %s1, %s385
        %s387 = smul.u32 2, %s24
        %s388 = smul.u32 2, %s24
        %v389 = vld [vmem:[%s379] sm:$0xff]
        %v390 = vld [vmem:[%s379 + $0x8] sm:$0xff]
        %v391 = vld [vmem:[%s379 + $0x10] sm:$0xff]
        %v392 = vld [vmem:[%s379 + $0x18] sm:$0xff]
        %v393 = vld [vmem:[%s379 + $0x20] sm:$0xff]
        %v394 = vld [vmem:[%s379 + $0x28] sm:$0xff]
        %v395 = vld [vmem:[%s379 + $0x30] sm:$0xff]
        %v396 = vld [vmem:[%s379 + $0x38] sm:$0xff]
        %v397 = vld [vmem:[%s379 + $0x40] sm:$0xff]
        %v398 = vld [vmem:[%s379 + $0x48] sm:$0xff]
        %v399 = vld [vmem:[%s379 + $0x50] sm:$0xff]
        %v400 = vld [vmem:[%s379 + $0x58] sm:$0xff]
        %v401 = vld [vmem:[%s379 + $0x60] sm:$0xff]
        %v402 = vld [vmem:[%s379 + $0x68] sm:$0xff]
        %v403 = vld [vmem:[%s379 + $0x70] sm:$0xff]
        %v404 = vld [vmem:[%s379 + $0x78] sm:$0xff]
        %v405 = vld [vmem:[%s379 + $0x80] sm:$0xff]
        %v406 = vld [vmem:[%s379 + $0x88] sm:$0xff]
        %v407 = vld [vmem:[%s379 + $0x90] sm:$0xff]
        %v408 = vld [vmem:[%s379 + $0x98] sm:$0xff]
        %v409 = vld [vmem:[%s379 + $0xa0] sm:$0xff]
        %v410 = vld [vmem:[%s379 + $0xa8] sm:$0xff]
        %v411 = vld [vmem:[%s379 + $0xb0] sm:$0xff]
        %v412 = vld [vmem:[%s379 + $0xb8] sm:$0xff]
        %v413 = vld [vmem:[%s379 + $0xc0] sm:$0xff]
        %v414 = vld [vmem:[%s379 + $0xc8] sm:$0xff]
        %v415 = vld [vmem:[%s379 + $0xd0] sm:$0xff]
        %v416 = vld [vmem:[%s379 + $0xd8] sm:$0xff]
        %v417 = vld [vmem:[%s379 + $0xe0] sm:$0xff]
        %v418 = vld [vmem:[%s379 + $0xe8] sm:$0xff]
        %v419 = vld [vmem:[%s379 + $0xf0] sm:$0xff]
        %v420 = vld [vmem:[%s379 + $0xf8] sm:$0xff]
        %v421 = vld [vmem:[%s386] sm:$0xff]
        %v422 = vld [vmem:[%s386 + $0x8] sm:$0xff]
        %v423 = vld [vmem:[%s386 + $0x10] sm:$0xff]
        %v424 = vld [vmem:[%s386 + $0x18] sm:$0xff]
        %v425 = vld [vmem:[%s386 + $0x20] sm:$0xff]
        %v426 = vld [vmem:[%s386 + $0x28] sm:$0xff]
        %v427 = vld [vmem:[%s386 + $0x30] sm:$0xff]
        %v428 = vld [vmem:[%s386 + $0x38] sm:$0xff]
        %v429 = vld [vmem:[%s386 + $0x40] sm:$0xff]
        %v430 = vld [vmem:[%s386 + $0x48] sm:$0xff]
        %v431 = vld [vmem:[%s386 + $0x50] sm:$0xff]
        %v432 = vld [vmem:[%s386 + $0x58] sm:$0xff]
        %v433 = vld [vmem:[%s386 + $0x60] sm:$0xff]
        %v434 = vld [vmem:[%s386 + $0x68] sm:$0xff]
        %v435 = vld [vmem:[%s386 + $0x70] sm:$0xff]
        %v436 = vld [vmem:[%s386 + $0x78] sm:$0xff]
        %v437 = vld [vmem:[%s386 + $0x80] sm:$0xff]
        %v438 = vld [vmem:[%s386 + $0x88] sm:$0xff]
        %v439 = vld [vmem:[%s386 + $0x90] sm:$0xff]
        %v440 = vld [vmem:[%s386 + $0x98] sm:$0xff]
        %v441 = vld [vmem:[%s386 + $0xa0] sm:$0xff]
        %v442 = vld [vmem:[%s386 + $0xa8] sm:$0xff]
        %v443 = vld [vmem:[%s386 + $0xb0] sm:$0xff]
        %v444 = vld [vmem:[%s386 + $0xb8] sm:$0xff]
        %v445 = vld [vmem:[%s386 + $0xc0] sm:$0xff]
        %v446 = vld [vmem:[%s386 + $0xc8] sm:$0xff]
        %v447 = vld [vmem:[%s386 + $0xd0] sm:$0xff]
        %v448 = vld [vmem:[%s386 + $0xd8] sm:$0xff]
        %v449 = vld [vmem:[%s386 + $0xe0] sm:$0xff]
        %v450 = vld [vmem:[%s386 + $0xe8] sm:$0xff]
        %v451 = vld [vmem:[%s386 + $0xf0] sm:$0xff]
        %v452 = vld [vmem:[%s386 + $0xf8] sm:$0xff]
        %v453 = vld [vmem:[%s2] sm:$0xff]
        %v454 = vld [vmem:[%s2 + $0x8] sm:$0xff]
        %v455 = vld [vmem:[%s3] sm:$0x1]
        %v456 = vld [vmem:[%s4] sm:$0xff]
        %v457 = vld [vmem:[%s4 + $0x8] sm:$0xff]
        %v458 = vld [vmem:[%s5] sm:$0x1]
        %vm459 = vcmask 130048
        %v461 = vsel %vm459, %v421, 0
        %v464 = vsel %vm459, %v422, 0
        %v467 = vsel %vm459, %v423, 0
        %v470 = vsel %vm459, %v424, 0
        %v473 = vsel %vm459, %v425, 0
        %v476 = vsel %vm459, %v426, 0
        %v479 = vsel %vm459, %v427, 0
        %v482 = vsel %vm459, %v428, 0
        %v485 = vsel %vm459, %v429, 0
        %v488 = vsel %vm459, %v430, 0
        %v491 = vsel %vm459, %v431, 0
        %v494 = vsel %vm459, %v432, 0
        %v497 = vsel %vm459, %v433, 0
        %v500 = vsel %vm459, %v434, 0
        %v503 = vsel %vm459, %v435, 0
        %v506 = vsel %vm459, %v436, 0
        %v509 = vsel %vm459, %v437, 0
        %v512 = vsel %vm459, %v438, 0
        %v515 = vsel %vm459, %v439, 0
        %v518 = vsel %vm459, %v440, 0
        %v521 = vsel %vm459, %v441, 0
        %v524 = vsel %vm459, %v442, 0
        %v527 = vsel %vm459, %v443, 0
        %v530 = vsel %vm459, %v444, 0
        %v533 = vsel %vm459, %v445, 0
        %v536 = vsel %vm459, %v446, 0
        %v539 = vsel %vm459, %v447, 0
        %v542 = vsel %vm459, %v448, 0
        %v545 = vsel %vm459, %v449, 0
        %v548 = vsel %vm459, %v450, 0
        %v551 = vsel %vm459, %v451, 0
        %v554 = vsel %vm459, %v452, 0
        %556 = vmatprep.subr.mxu0 0.0
        %557 = vmatpush1.msra.mxu0 %v453
        %558 = vmatprep.subr.mxu0 0.0
        %559 = vmatpush1.msra.mxu0 %v454
        %560 = vmatprep.subr.mxu0 0.0
        %561 = vmatpush1.msra.mxu0 0.0
        %562 = vmatprep.subr.mxu0 0.0
        %563 = vmatpush1.msra.mxu0 0.0
        %564 = vmatprep.subr.mxu0 0.0
        %565 = vmatpush1.msra.mxu0 0.0
        %566 = vmatprep.subr.mxu0 0.0
        %567 = vmatpush1.msra.mxu0 0.0
        %568 = vmatprep.subr.mxu0 0.0
        %569 = vmatpush1.msra.mxu0 0.0
        %570 = vmatprep.subr.mxu0 0.0
        %571 = vmatpush1.msra.mxu0 0.0
        %572 = vmatprep.subr.mxu0 0.0
        %573 = vmatpush1.msra.mxu0 0.0
        %574 = vmatprep.subr.mxu0 0.0
        %575 = vmatpush1.msra.mxu0 0.0
        %576 = vmatprep.subr.mxu0 0.0
        %577 = vmatpush1.msra.mxu0 0.0
        %578 = vmatprep.subr.mxu0 0.0
        %579 = vmatpush1.msra.mxu0 0.0
        %580 = vmatprep.subr.mxu0 0.0
        %581 = vmatpush1.msra.mxu0 0.0
        %582 = vmatprep.subr.mxu0 0.0
        %583 = vmatpush1.msra.mxu0 0.0
        %584 = vmatprep.subr.mxu0 0.0
        %585 = vmatpush1.msra.mxu0 0.0
        %586 = vmatprep.subr.mxu0 0.0
        %587 = vmatpush1.msra.mxu0 0.0
        %588 = vmatprep.subr.mxu0 0.0
        %589 = vmatpush1.msra.mxu0 0.0
        %590 = vmatprep.subr.mxu0 0.0
        %591 = vmatpush1.msra.mxu0 0.0
        %592 = vmatprep.subr.mxu0 0.0
        %593 = vmatpush1.msra.mxu0 0.0
        %594 = vmatprep.subr.mxu0 0.0
        %595 = vmatpush1.msra.mxu0 0.0
        %596 = vmatprep.subr.mxu0 0.0
        %597 = vmatpush1.msra.mxu0 0.0
        %598 = vmatprep.subr.mxu0 0.0
        %599 = vmatpush1.msra.mxu0 0.0
        %600 = vmatprep.subr.mxu0 0.0
        %601 = vmatpush1.msra.mxu0 0.0
        %602 = vmatprep.subr.mxu0 0.0
        %603 = vmatpush1.msra.mxu0 0.0
        %604 = vmatprep.subr.mxu0 0.0
        %605 = vmatpush1.msra.mxu0 0.0
        %606 = vmatprep.subr.mxu0 0.0
        %607 = vmatpush1.msra.mxu0 0.0
        %608 = vmatprep.subr.mxu0 0.0
        %609 = vmatpush1.msra.mxu0 0.0
        %610 = vmatprep.subr.mxu0 0.0
        %611 = vmatpush1.msra.mxu0 0.0
        %612 = vmatprep.subr.mxu0 0.0
        %613 = vmatpush1.msra.mxu0 0.0
        %614 = vmatprep.subr.mxu0 0.0
        %615 = vmatpush1.msra.mxu0 0.0
        %616 = vmatprep.subr.mxu0 0.0
        %617 = vmatpush1.msra.mxu0 0.0
        %618 = vmatprep.subr.mxu0 0.0
        %619 = vmatpush1.msra.mxu0 0.0
        %620 = vmatprep.mubr.f32.mxu0 0.0
        %621 = vmatmul.mubr.f32.gmra.mrb[0].mxu0 %v461
        %v622 = vpop.f32.mrb[0].mxu0
        %v623 = vadd.f32 0.0, %v622
        %v624 = vpop.f32.mrb[0].mxu0
        %625 = vmatprep.mubr.f32.mxu0 0.0
        %626 = vmatmul.mubr.f32.gmra.mrb[0].mxu0 %v464
        %v627 = vpop.f32.mrb[0].mxu0
        %v628 = vadd.f32 0.0, %v627
        %v629 = vpop.f32.mrb[0].mxu0
        %630 = vmatprep.mubr.f32.mxu0 0.0
        %631 = vmatmul.mubr.f32.gmra.mrb[0].mxu0 %v467
        %v632 = vpop.f32.mrb[0].mxu0
        %v633 = vadd.f32 0.0, %v632
        %v634 = vpop.f32.mrb[0].mxu0
        %635 = vmatprep.mubr.f32.mxu0 0.0
        %636 = vmatmul.mubr.f32.gmra.mrb[0].mxu0 %v470
        %v637 = vpop.f32.mrb[0].mxu0
        %v638 = vadd.f32 0.0, %v637
        %v639 = vpop.f32.mrb[0].mxu0
        %640 = vmatprep.mubr.f32.mxu0 0.0
        %641 = vmatmul.mubr.f32.gmra.mrb[0].mxu0 %v473
        %v642 = vpop.f32.mrb[0].mxu0
        %v643 = vadd.f32 0.0, %v642
        %v644 = vpop.f32.mrb[0].mxu0
        %645 = vmatprep.mubr.f32.mxu0 0.0
        %646 = vmatmul.mubr.f32.gmra.mrb[0].mxu0 %v476
        %v647 = vpop.f32.mrb[0].mxu0
        %v648 = vadd.f32 0.0, %v647
        %v649 = vpop.f32.mrb[0].mxu0
        %650 = vmatprep.mubr.f32.mxu0 0.0
        %651 = vmatmul.mubr.f32.gmra.mrb[0].mxu0 %v479
        %v652 = vpop.f32.mrb[0].mxu0
        %v653 = vadd.f32 0.0, %v652
        %v654 = vpop.f32.mrb[0].mxu0
        %655 = vmatprep.mubr.f32.mxu0 0.0
        %656 = vmatmul.mubr.f32.gmra.mrb[0].mxu0 %v482
        %v657 = vpop.f32.mrb[0].mxu0
        %v658 = vadd.f32 0.0, %v657
        %v659 = vpop.f32.mrb[0].mxu0
        %660 = vmatprep.mubr.f32.mxu0 0.0
        %661 = vmatmul.mubr.f32.gmra.mrb[0].mxu0 %v485
        %v662 = vpop.f32.mrb[0].mxu0
        %v663 = vadd.f32 0.0, %v662
        %v664 = vpop.f32.mrb[0].mxu0
        %665 = vmatprep.mubr.f32.mxu0 0.0
        %666 = vmatmul.mubr.f32.gmra.mrb[0].mxu0 %v488
        %v667 = vpop.f32.mrb[0].mxu0
        %v668 = vadd.f32 0.0, %v667
        %v669 = vpop.f32.mrb[0].mxu0
        %670 = vmatprep.mubr.f32.mxu0 0.0
        %671 = vmatmul.mubr.f32.gmra.mrb[0].mxu0 %v491
        %v672 = vpop.f32.mrb[0].mxu0
        %v673 = vadd.f32 0.0, %v672
        %v674 = vpop.f32.mrb[0].mxu0
        %675 = vmatprep.mubr.f32.mxu0 0.0
        %676 = vmatmul.mubr.f32.gmra.mrb[0].mxu0 %v494
        %v677 = vpop.f32.mrb[0].mxu0
        %v678 = vadd.f32 0.0, %v677
        %v679 = vpop.f32.mrb[0].mxu0
        %680 = vmatprep.mubr.f32.mxu0 0.0
        %681 = vmatmul.mubr.f32.gmra.mrb[0].mxu0 %v497
        %v682 = vpop.f32.mrb[0].mxu0
        %v683 = vadd.f32 0.0, %v682
        %v684 = vpop.f32.mrb[0].mxu0
        %685 = vmatprep.mubr.f32.mxu0 0.0
        %686 = vmatmul.mubr.f32.gmra.mrb[0].mxu0 %v500
        %v687 = vpop.f32.mrb[0].mxu0
        %v688 = vadd.f32 0.0, %v687
        %v689 = vpop.f32.mrb[0].mxu0
        %690 = vmatprep.mubr.f32.mxu0 0.0
        %691 = vmatmul.mubr.f32.gmra.mrb[0].mxu0 %v503
        %v692 = vpop.f32.mrb[0].mxu0
        %v693 = vadd.f32 0.0, %v692
        %v694 = vpop.f32.mrb[0].mxu0
        %695 = vmatprep.mubr.f32.mxu0 0.0
        %696 = vmatmul.mubr.f32.gmra.mrb[0].mxu0 %v506
        %v697 = vpop.f32.mrb[0].mxu0
        %v698 = vadd.f32 0.0, %v697
        %v699 = vpop.f32.mrb[0].mxu0
        %700 = vmatprep.mubr.f32.mxu0 0.0
        %701 = vmatmul.mubr.f32.gmra.mrb[0].mxu0 %v509
        %v702 = vpop.f32.mrb[0].mxu0
        %v703 = vadd.f32 0.0, %v702
        %v704 = vpop.f32.mrb[0].mxu0
        %705 = vmatprep.mubr.f32.mxu0 0.0
        %706 = vmatmul.mubr.f32.gmra.mrb[0].mxu0 %v512
        %v707 = vpop.f32.mrb[0].mxu0
        %v708 = vadd.f32 0.0, %v707
        %v709 = vpop.f32.mrb[0].mxu0
        %710 = vmatprep.mubr.f32.mxu0 0.0
        %711 = vmatmul.mubr.f32.gmra.mrb[0].mxu0 %v515
        %v712 = vpop.f32.mrb[0].mxu0
        %v713 = vadd.f32 0.0, %v712
        %v714 = vpop.f32.mrb[0].mxu0
        %715 = vmatprep.mubr.f32.mxu0 0.0
        %716 = vmatmul.mubr.f32.gmra.mrb[0].mxu0 %v518
        %v717 = vpop.f32.mrb[0].mxu0
        %v718 = vadd.f32 0.0, %v717
        %v719 = vpop.f32.mrb[0].mxu0
        %720 = vmatprep.mubr.f32.mxu0 0.0
        %721 = vmatmul.mubr.f32.gmra.mrb[0].mxu0 %v521
        %v722 = vpop.f32.mrb[0].mxu0
        %v723 = vadd.f32 0.0, %v722
        %v724 = vpop.f32.mrb[0].mxu0
        %725 = vmatprep.mubr.f32.mxu0 0.0
        %726 = vmatmul.mubr.f32.gmra.mrb[0].mxu0 %v524
        %v727 = vpop.f32.mrb[0].mxu0
        %v728 = vadd.f32 0.0, %v727
        %v729 = vpop.f32.mrb[0].mxu0
        %730 = vmatprep.mubr.f32.mxu0 0.0
        %731 = vmatmul.mubr.f32.gmra.mrb[0].mxu0 %v527
        %v732 = vpop.f32.mrb[0].mxu0
        %v733 = vadd.f32 0.0, %v732
        %v734 = vpop.f32.mrb[0].mxu0
        %735 = vmatprep.mubr.f32.mxu0 0.0
        %736 = vmatmul.mubr.f32.gmra.mrb[0].mxu0 %v530
        %v737 = vpop.f32.mrb[0].mxu0
        %v738 = vadd.f32 0.0, %v737
        %v739 = vpop.f32.mrb[0].mxu0
        %740 = vmatprep.mubr.f32.mxu0 0.0
        %741 = vmatmul.mubr.f32.gmra.mrb[0].mxu0 %v533
        %v742 = vpop.f32.mrb[0].mxu0
        %v743 = vadd.f32 0.0, %v742
        %v744 = vpop.f32.mrb[0].mxu0
        %745 = vmatprep.mubr.f32.mxu0 0.0
        %746 = vmatmul.mubr.f32.gmra.mrb[0].mxu0 %v536
        %v747 = vpop.f32.mrb[0].mxu0
        %v748 = vadd.f32 0.0, %v747
        %v749 = vpop.f32.mrb[0].mxu0
        %750 = vmatprep.mubr.f32.mxu0 0.0
        %751 = vmatmul.mubr.f32.gmra.mrb[0].mxu0 %v539
        %v752 = vpop.f32.mrb[0].mxu0
        %v753 = vadd.f32 0.0, %v752
        %v754 = vpop.f32.mrb[0].mxu0
        %755 = vmatprep.mubr.f32.mxu0 0.0
        %756 = vmatmul.mubr.f32.gmra.mrb[0].mxu0 %v542
        %v757 = vpop.f32.mrb[0].mxu0
        %v758 = vadd.f32 0.0, %v757
        %v759 = vpop.f32.mrb[0].mxu0
        %760 = vmatprep.mubr.f32.mxu0 0.0
        %761 = vmatmul.mubr.f32.gmra.mrb[0].mxu0 %v545
        %v762 = vpop.f32.mrb[0].mxu0
        %v763 = vadd.f32 0.0, %v762
        %v764 = vpop.f32.mrb[0].mxu0
        %765 = vmatprep.mubr.f32.mxu0 0.0
        %766 = vmatmul.mubr.f32.gmra.mrb[0].mxu0 %v548
        %v767 = vpop.f32.mrb[0].mxu0
        %v768 = vadd.f32 0.0, %v767
        %v769 = vpop.f32.mrb[0].mxu0
        %770 = vmatprep.mubr.f32.mxu0 0.0
        %771 = vmatmul.mubr.f32.gmra.mrb[0].mxu0 %v551
        %v772 = vpop.f32.mrb[0].mxu0
        %v773 = vadd.f32 0.0, %v772
        %v774 = vpop.f32.mrb[0].mxu0
        %775 = vmatprep.mubr.f32.mxu0 0.0
        %776 = vmatmul.mubr.f32.gmra.mrb[0].mxu0 %v554
        %v777 = vpop.f32.mrb[0].mxu0
        %v778 = vadd.f32 0.0, %v777
        %v779 = vpop.f32.mrb[0].mxu0
        %780 = vdwg.mxu0
        %781 = vmatprep.subr.mxu0 0.0
        %782 = vmatpush1.msra.mxu0 %v623
        %783 = vmatprep.subr.mxu0 0.0
        %784 = vmatpush1.msra.mxu0 %v628
        %785 = vmatprep.subr.mxu0 0.0
        %786 = vmatpush1.msra.mxu0 %v633
        %787 = vmatprep.subr.mxu0 0.0
        %788 = vmatpush1.msra.mxu0 %v638
        %789 = vmatprep.subr.mxu0 0.0
        %790 = vmatpush1.msra.mxu0 %v643
        %791 = vmatprep.subr.mxu0 0.0
        %792 = vmatpush1.msra.mxu0 %v648
        %793 = vmatprep.subr.mxu0 0.0
        %794 = vmatpush1.msra.mxu0 %v653
        %795 = vmatprep.subr.mxu0 0.0
        %796 = vmatpush1.msra.mxu0 %v658
        %797 = vmatprep.subr.mxu0 0.0
        %798 = vmatpush1.msra.mxu0 %v663
        %799 = vmatprep.subr.mxu0 0.0
        %800 = vmatpush1.msra.mxu0 %v668
        %801 = vmatprep.subr.mxu0 0.0
        %802 = vmatpush1.msra.mxu0 %v673
        %803 = vmatprep.subr.mxu0 0.0
        %804 = vmatpush1.msra.mxu0 %v678
        %805 = vmatprep.subr.mxu0 0.0
        %806 = vmatpush1.msra.mxu0 %v683
        %807 = vmatprep.subr.mxu0 0.0
        %808 = vmatpush1.msra.mxu0 %v688
        %809 = vmatprep.subr.mxu0 0.0
        %810 = vmatpush1.msra.mxu0 %v693
        %811 = vmatprep.subr.mxu0 0.0
        %812 = vmatpush1.msra.mxu0 %v698
        %813 = vmatprep.subr.mxu0 0.0
        %814 = vmatpush1.msra.mxu0 0.0
        %815 = vmatprep.subr.mxu0 0.0
        %816 = vmatpush1.msra.mxu0 0.0
        %817 = vmatprep.subr.mxu0 0.0
        %818 = vmatpush1.msra.mxu0 0.0
        %819 = vmatprep.subr.mxu0 0.0
        %820 = vmatpush1.msra.mxu0 0.0
        %821 = vmatprep.subr.mxu0 0.0
        %822 = vmatpush1.msra.mxu0 0.0
        %823 = vmatprep.subr.mxu0 0.0
        %824 = vmatpush1.msra.mxu0 0.0
        %825 = vmatprep.subr.mxu0 0.0
        %826 = vmatpush1.msra.mxu0 0.0
        %827 = vmatprep.subr.mxu0 0.0
        %828 = vmatpush1.msra.mxu0 0.0
        %829 = vmatprep.subr.mxu0 0.0
        %830 = vmatpush1.msra.mxu0 0.0
        %831 = vmatprep.subr.mxu0 0.0
        %832 = vmatpush1.msra.mxu0 0.0
        %833 = vmatprep.subr.mxu0 0.0
        %834 = vmatpush1.msra.mxu0 0.0
        %835 = vmatprep.subr.mxu0 0.0
        %836 = vmatpush1.msra.mxu0 0.0
        %837 = vmatprep.subr.mxu0 0.0
        %838 = vmatpush1.msra.mxu0 0.0
        %839 = vmatprep.subr.mxu0 0.0
        %840 = vmatpush1.msra.mxu0 0.0
        %841 = vmatprep.subr.mxu0 0.0
        %842 = vmatpush1.msra.mxu0 0.0
        %843 = vmatprep.subr.mxu0 0.0
        %844 = vmatpush1.msra.mxu0 0.0
        %845 = vmatprep.mubr.f32.mxu0 0.0
        %846 = vmatmul.mubr.f32.gmra.mrb[0].mxu0 %v389
        %v847 = vpop.f32.mrb[0].mxu0
        %v848 = vadd.f32 0.0, %v847
        %v849 = vpop.f32.mrb[0].mxu0
        %850 = vmatprep.mubr.f32.mxu0 0.0
        %851 = vmatmul.mubr.f32.gmra.mrb[0].mxu0 %v390
        %v852 = vpop.f32.mrb[0].mxu0
        %v853 = vadd.f32 0.0, %v852
        %v854 = vpop.f32.mrb[0].mxu0
        %855 = vmatprep.mubr.f32.mxu0 0.0
        %856 = vmatmul.mubr.f32.gmra.mrb[0].mxu0 %v391
        %v857 = vpop.f32.mrb[0].mxu0
        %v858 = vadd.f32 0.0, %v857
        %v859 = vpop.f32.mrb[0].mxu0
        %860 = vmatprep.mubr.f32.mxu0 0.0
        %861 = vmatmul.mubr.f32.gmra.mrb[0].mxu0 %v392
        %v862 = vpop.f32.mrb[0].mxu0
        %v863 = vadd.f32 0.0, %v862
        %v864 = vpop.f32.mrb[0].mxu0
        %865 = vmatprep.mubr.f32.mxu0 0.0
        %866 = vmatmul.mubr.f32.gmra.mrb[0].mxu0 %v393
        %v867 = vpop.f32.mrb[0].mxu0
        %v868 = vadd.f32 0.0, %v867
        %v869 = vpop.f32.mrb[0].mxu0
        %870 = vmatprep.mubr.f32.mxu0 0.0
        %871 = vmatmul.mubr.f32.gmra.mrb[0].mxu0 %v394
        %v872 = vpop.f32.mrb[0].mxu0
        %v873 = vadd.f32 0.0, %v872
        %v874 = vpop.f32.mrb[0].mxu0
        %875 = vmatprep.mubr.f32.mxu0 0.0
        %876 = vmatmul.mubr.f32.gmra.mrb[0].mxu0 %v395
        %v877 = vpop.f32.mrb[0].mxu0
        %v878 = vadd.f32 0.0, %v877
        %v879 = vpop.f32.mrb[0].mxu0
        %880 = vmatprep.mubr.f32.mxu0 0.0
        %881 = vmatmul.mubr.f32.gmra.mrb[0].mxu0 %v396
        %v882 = vpop.f32.mrb[0].mxu0
        %v883 = vadd.f32 0.0, %v882
        %v884 = vpop.f32.mrb[0].mxu0
        %885 = vmatprep.mubr.f32.mxu0 0.0
        %886 = vmatmul.mubr.f32.gmra.mrb[0].mxu0 %v397
        %v887 = vpop.f32.mrb[0].mxu0
        %v888 = vadd.f32 0.0, %v887
        %v889 = vpop.f32.mrb[0].mxu0
        %890 = vmatprep.mubr.f32.mxu0 0.0
        %891 = vmatmul.mubr.f32.gmra.mrb[0].mxu0 %v398
        %v892 = vpop.f32.mrb[0].mxu0
        %v893 = vadd.f32 0.0, %v892
        %v894 = vpop.f32.mrb[0].mxu0
        %895 = vmatprep.mubr.f32.mxu0 0.0
        %896 = vmatmul.mubr.f32.gmra.mrb[0].mxu0 %v399
        %v897 = vpop.f32.mrb[0].mxu0
        %v898 = vadd.f32 0.0, %v897
        %v899 = vpop.f32.mrb[0].mxu0
        %900 = vmatprep.mubr.f32.mxu0 0.0
        %901 = vmatmul.mubr.f32.gmra.mrb[0].mxu0 %v400
        %v902 = vpop.f32.mrb[0].mxu0
        %v903 = vadd.f32 0.0, %v902
        %v904 = vpop.f32.mrb[0].mxu0
        %905 = vmatprep.mubr.f32.mxu0 0.0
        %906 = vmatmul.mubr.f32.gmra.mrb[0].mxu0 %v401
        %v907 = vpop.f32.mrb[0].mxu0
        %v908 = vadd.f32 0.0, %v907
        %v909 = vpop.f32.mrb[0].mxu0
        %910 = vmatprep.mubr.f32.mxu0 0.0
        %911 = vmatmul.mubr.f32.gmra.mrb[0].mxu0 %v402
        %v912 = vpop.f32.mrb[0].mxu0
        %v913 = vadd.f32 0.0, %v912
        %v914 = vpop.f32.mrb[0].mxu0
        %915 = vmatprep.mubr.f32.mxu0 0.0
        %916 = vmatmul.mubr.f32.gmra.mrb[0].mxu0 %v403
        %v917 = vpop.f32.mrb[0].mxu0
        %v918 = vadd.f32 0.0, %v917
        %v919 = vpop.f32.mrb[0].mxu0
        %920 = vmatprep.mubr.f32.mxu0 0.0
        %921 = vmatmul.mubr.f32.gmra.mrb[0].mxu0 %v404
        %v922 = vpop.f32.mrb[0].mxu0
        %v923 = vadd.f32 0.0, %v922
        %v924 = vpop.f32.mrb[0].mxu0
        %925 = vdwg.mxu0
        %926 = vmatprep.subr.mxu0 0.0
        %927 = vmatpush1.msra.mxu0 %v703
        %928 = vmatprep.subr.mxu0 0.0
        %929 = vmatpush1.msra.mxu0 %v708
        %930 = vmatprep.subr.mxu0 0.0
        %931 = vmatpush1.msra.mxu0 %v713
        %932 = vmatprep.subr.mxu0 0.0
        %933 = vmatpush1.msra.mxu0 %v718
        %934 = vmatprep.subr.mxu0 0.0
        %935 = vmatpush1.msra.mxu0 %v723
        %936 = vmatprep.subr.mxu0 0.0
        %937 = vmatpush1.msra.mxu0 %v728
        %938 = vmatprep.subr.mxu0 0.0
        %939 = vmatpush1.msra.mxu0 %v733
        %940 = vmatprep.subr.mxu0 0.0
        %941 = vmatpush1.msra.mxu0 %v738
        %942 = vmatprep.subr.mxu0 0.0
        %943 = vmatpush1.msra.mxu0 %v743
        %944 = vmatprep.subr.mxu0 0.0
        %945 = vmatpush1.msra.mxu0 %v748
        %946 = vmatprep.subr.mxu0 0.0
        %947 = vmatpush1.msra.mxu0 %v753
        %948 = vmatprep.subr.mxu0 0.0
        %949 = vmatpush1.msra.mxu0 %v758
        %950 = vmatprep.subr.mxu0 0.0
        %951 = vmatpush1.msra.mxu0 %v763
        %952 = vmatprep.subr.mxu0 0.0
        %953 = vmatpush1.msra.mxu0 %v768
        %954 = vmatprep.subr.mxu0 0.0
        %955 = vmatpush1.msra.mxu0 %v773
        %956 = vmatprep.subr.mxu0 0.0
        %957 = vmatpush1.msra.mxu0 %v778
        %958 = vmatprep.subr.mxu0 0.0
        %959 = vmatpush1.msra.mxu0 0.0
        %960 = vmatprep.subr.mxu0 0.0
        %961 = vmatpush1.msra.mxu0 0.0
        %962 = vmatprep.subr.mxu0 0.0
        %963 = vmatpush1.msra.mxu0 0.0
        %964 = vmatprep.subr.mxu0 0.0
        %965 = vmatpush1.msra.mxu0 0.0
        %966 = vmatprep.subr.mxu0 0.0
        %967 = vmatpush1.msra.mxu0 0.0
        %968 = vmatprep.subr.mxu0 0.0
        %969 = vmatpush1.msra.mxu0 0.0
        %970 = vmatprep.subr.mxu0 0.0
        %971 = vmatpush1.msra.mxu0 0.0
        %972 = vmatprep.subr.mxu0 0.0
        %973 = vmatpush1.msra.mxu0 0.0
        %974 = vmatprep.subr.mxu0 0.0
        %975 = vmatpush1.msra.mxu0 0.0
        %976 = vmatprep.subr.mxu0 0.0
        %977 = vmatpush1.msra.mxu0 0.0
        %978 = vmatprep.subr.mxu0 0.0
        %979 = vmatpush1.msra.mxu0 0.0
        %980 = vmatprep.subr.mxu0 0.0
        %981 = vmatpush1.msra.mxu0 0.0
        %982 = vmatprep.subr.mxu0 0.0
        %983 = vmatpush1.msra.mxu0 0.0
        %984 = vmatprep.subr.mxu0 0.0
        %985 = vmatpush1.msra.mxu0 0.0
        %986 = vmatprep.subr.mxu0 0.0
        %987 = vmatpush1.msra.mxu0 0.0
        %988 = vmatprep.subr.mxu0 0.0
        %989 = vmatpush1.msra.mxu0 0.0
        %990 = vmatprep.mubr.f32.mxu0 0.0
        %991 = vmatmul.mubr.f32.gmra.mrb[0].mxu0 %v405
        %v992 = vpop.f32.mrb[0].mxu0
        %v993 = vadd.f32 0.0, %v992
        %v994 = vpop.f32.mrb[0].mxu0
        %995 = vmatprep.mubr.f32.mxu0 0.0
        %996 = vmatmul.mubr.f32.gmra.mrb[0].mxu0 %v406
        %v997 = vpop.f32.mrb[0].mxu0
        %v998 = vadd.f32 0.0, %v997
        %v999 = vpop.f32.mrb[0].mxu0
        %1000 = vmatprep.mubr.f32.mxu0 0.0
        %1001 = vmatmul.mubr.f32.gmra.mrb[0].mxu0 %v407
        %v1002 = vpop.f32.mrb[0].mxu0
        %v1003 = vadd.f32 0.0, %v1002
        %v1004 = vpop.f32.mrb[0].mxu0
        %1005 = vmatprep.mubr.f32.mxu0 0.0
        %1006 = vmatmul.mubr.f32.gmra.mrb[0].mxu0 %v408
        %v1007 = vpop.f32.mrb[0].mxu0
        %v1008 = vadd.f32 0.0, %v1007
        %v1009 = vpop.f32.mrb[0].mxu0
        %1010 = vmatprep.mubr.f32.mxu0 0.0
        %1011 = vmatmul.mubr.f32.gmra.mrb[0].mxu0 %v409
        %v1012 = vpop.f32.mrb[0].mxu0
        %v1013 = vadd.f32 0.0, %v1012
        %v1014 = vpop.f32.mrb[0].mxu0
        %1015 = vmatprep.mubr.f32.mxu0 0.0
        %1016 = vmatmul.mubr.f32.gmra.mrb[0].mxu0 %v410
        %v1017 = vpop.f32.mrb[0].mxu0
        %v1018 = vadd.f32 0.0, %v1017
        %v1019 = vpop.f32.mrb[0].mxu0
        %1020 = vmatprep.mubr.f32.mxu0 0.0
        %1021 = vmatmul.mubr.f32.gmra.mrb[0].mxu0 %v411
        %v1022 = vpop.f32.mrb[0].mxu0
        %v1023 = vadd.f32 0.0, %v1022
        %v1024 = vpop.f32.mrb[0].mxu0
        %1025 = vmatprep.mubr.f32.mxu0 0.0
        %1026 = vmatmul.mubr.f32.gmra.mrb[0].mxu0 %v412
        %v1027 = vpop.f32.mrb[0].mxu0
        %v1028 = vadd.f32 0.0, %v1027
        %v1029 = vpop.f32.mrb[0].mxu0
        %1030 = vmatprep.mubr.f32.mxu0 0.0
        %1031 = vmatmul.mubr.f32.gmra.mrb[0].mxu0 %v413
        %v1032 = vpop.f32.mrb[0].mxu0
        %v1033 = vadd.f32 0.0, %v1032
        %v1034 = vpop.f32.mrb[0].mxu0
        %1035 = vmatprep.mubr.f32.mxu0 0.0
        %1036 = vmatmul.mubr.f32.gmra.mrb[0].mxu0 %v414
        %v1037 = vpop.f32.mrb[0].mxu0
        %v1038 = vadd.f32 0.0, %v1037
        %v1039 = vpop.f32.mrb[0].mxu0
        %1040 = vmatprep.mubr.f32.mxu0 0.0
        %1041 = vmatmul.mubr.f32.gmra.mrb[0].mxu0 %v415
        %v1042 = vpop.f32.mrb[0].mxu0
        %v1043 = vadd.f32 0.0, %v1042
        %v1044 = vpop.f32.mrb[0].mxu0
        %1045 = vmatprep.mubr.f32.mxu0 0.0
        %1046 = vmatmul.mubr.f32.gmra.mrb[0].mxu0 %v416
        %v1047 = vpop.f32.mrb[0].mxu0
        %v1048 = vadd.f32 0.0, %v1047
        %v1049 = vpop.f32.mrb[0].mxu0
        %1050 = vmatprep.mubr.f32.mxu0 0.0
        %1051 = vmatmul.mubr.f32.gmra.mrb[0].mxu0 %v417
        %v1052 = vpop.f32.mrb[0].mxu0
        %v1053 = vadd.f32 0.0, %v1052
        %v1054 = vpop.f32.mrb[0].mxu0
        %1055 = vmatprep.mubr.f32.mxu0 0.0
        %1056 = vmatmul.mubr.f32.gmra.mrb[0].mxu0 %v418
        %v1057 = vpop.f32.mrb[0].mxu0
        %v1058 = vadd.f32 0.0, %v1057
        %v1059 = vpop.f32.mrb[0].mxu0
        %1060 = vmatprep.mubr.f32.mxu0 0.0
        %1061 = vmatmul.mubr.f32.gmra.mrb[0].mxu0 %v419
        %v1062 = vpop.f32.mrb[0].mxu0
        %v1063 = vadd.f32 0.0, %v1062
        %v1064 = vpop.f32.mrb[0].mxu0
        %1065 = vmatprep.mubr.f32.mxu0 0.0
        %1066 = vmatmul.mubr.f32.gmra.mrb[0].mxu0 %v420
        %v1067 = vpop.f32.mrb[0].mxu0
        %v1068 = vadd.f32 0.0, %v1067
        %v1069 = vpop.f32.mrb[0].mxu0
        %1070 = vdwg.mxu0
        %v1072 = vlaneseq
        %v1073 = vshrl.u32 %v1072, 7
        %v1074 = vsub.s32 0, %v1073
        %v1075 = vrot.slane %v455, %v1074
        %v1077 = vadd.f32 %v848, %v1075
        %v1078 = vadd.f32 %v853, %v1075
        %v1079 = vadd.f32 %v858, %v1075
        %v1080 = vadd.f32 %v863, %v1075
        %v1081 = vadd.f32 %v868, %v1075
        %v1082 = vadd.f32 %v873, %v1075
        %v1083 = vadd.f32 %v878, %v1075
        %v1084 = vadd.f32 %v883, %v1075
        %v1085 = vadd.f32 %v888, %v1075
        %v1086 = vadd.f32 %v893, %v1075
        %v1087 = vadd.f32 %v898, %v1075
        %v1088 = vadd.f32 %v903, %v1075
        %v1089 = vadd.f32 %v908, %v1075
        %v1090 = vadd.f32 %v913, %v1075
        %v1091 = vadd.f32 %v918, %v1075
        %v1092 = vadd.f32 %v923, %v1075
        %v1093 = vadd.f32 %v993, %v1075
        %v1094 = vadd.f32 %v998, %v1075
        %v1095 = vadd.f32 %v1003, %v1075
        %v1096 = vadd.f32 %v1008, %v1075
        %v1097 = vadd.f32 %v1013, %v1075
        %v1098 = vadd.f32 %v1018, %v1075
        %v1099 = vadd.f32 %v1023, %v1075
        %v1100 = vadd.f32 %v1028, %v1075
        %v1101 = vadd.f32 %v1033, %v1075
        %v1102 = vadd.f32 %v1038, %v1075
        %v1103 = vadd.f32 %v1043, %v1075
        %v1104 = vadd.f32 %v1048, %v1075
        %v1105 = vadd.f32 %v1053, %v1075
        %v1106 = vadd.f32 %v1058, %v1075
        %v1107 = vadd.f32 %v1063, %v1075
        %v1108 = vadd.f32 %v1068, %v1075
        %v1110 = vlaneseq
        %v1111 = vshrl.u32 %v1110, 7
        %v1112 = vsub.s32 0, %v1111
        %v1113 = vrot.slane %v458, %v1112
        %1115 = vmatprep.subr.mxu0 0.0
        %1116 = vmatpush1.msra.mxu0 %v456
        %1117 = vmatprep.subr.mxu0 0.0
        %1118 = vmatpush1.msra.mxu0 %v457
        %1119 = vmatprep.subr.mxu0 0.0
        %1120 = vmatpush1.msra.mxu0 0.0
        %1121 = vmatprep.subr.mxu0 0.0
        %1122 = vmatpush1.msra.mxu0 0.0
        %1123 = vmatprep.subr.mxu0 0.0
        %1124 = vmatpush1.msra.mxu0 0.0
        %1125 = vmatprep.subr.mxu0 0.0
        %1126 = vmatpush1.msra.mxu0 0.0
        %1127 = vmatprep.subr.mxu0 0.0
        %1128 = vmatpush1.msra.mxu0 0.0
        %1129 = vmatprep.subr.mxu0 0.0
        %1130 = vmatpush1.msra.mxu0 0.0
        %1131 = vmatprep.subr.mxu0 0.0
        %1132 = vmatpush1.msra.mxu0 0.0
        %1133 = vmatprep.subr.mxu0 0.0
        %1134 = vmatpush1.msra.mxu0 0.0
        %1135 = vmatprep.subr.mxu0 0.0
        %1136 = vmatpush1.msra.mxu0 0.0
        %1137 = vmatprep.subr.mxu0 0.0
        %1138 = vmatpush1.msra.mxu0 0.0
        %1139 = vmatprep.subr.mxu0 0.0
        %1140 = vmatpush1.msra.mxu0 0.0
        %1141 = vmatprep.subr.mxu0 0.0
        %1142 = vmatpush1.msra.mxu0 0.0
        %1143 = vmatprep.subr.mxu0 0.0
        %1144 = vmatpush1.msra.mxu0 0.0
        %1145 = vmatprep.subr.mxu0 0.0
        %1146 = vmatpush1.msra.mxu0 0.0
        %1147 = vmatprep.subr.mxu0 0.0
        %1148 = vmatpush1.msra.mxu0 0.0
        %1149 = vmatprep.subr.mxu0 0.0
        %1150 = vmatpush1.msra.mxu0 0.0
        %1151 = vmatprep.subr.mxu0 0.0
        %1152 = vmatpush1.msra.mxu0 0.0
        %1153 = vmatprep.subr.mxu0 0.0
        %1154 = vmatpush1.msra.mxu0 0.0
        %1155 = vmatprep.subr.mxu0 0.0
        %1156 = vmatpush1.msra.mxu0 0.0
        %1157 = vmatprep.subr.mxu0 0.0
        %1158 = vmatpush1.msra.mxu0 0.0
        %1159 = vmatprep.subr.mxu0 0.0
        %1160 = vmatpush1.msra.mxu0 0.0
        %1161 = vmatprep.subr.mxu0 0.0
        %1162 = vmatpush1.msra.mxu0 0.0
        %1163 = vmatprep.subr.mxu0 0.0
        %1164 = vmatpush1.msra.mxu0 0.0
        %1165 = vmatprep.subr.mxu0 0.0
        %1166 = vmatpush1.msra.mxu0 0.0
        %1167 = vmatprep.subr.mxu0 0.0
        %1168 = vmatpush1.msra.mxu0 0.0
        %1169 = vmatprep.subr.mxu0 0.0
        %1170 = vmatpush1.msra.mxu0 0.0
        %1171 = vmatprep.subr.mxu0 0.0
        %1172 = vmatpush1.msra.mxu0 0.0
        %1173 = vmatprep.subr.mxu0 0.0
        %1174 = vmatpush1.msra.mxu0 0.0
        %1175 = vmatprep.subr.mxu0 0.0
        %1176 = vmatpush1.msra.mxu0 0.0
        %1177 = vmatprep.subr.mxu0 0.0
        %1178 = vmatpush1.msra.mxu0 0.0
        %1179 = vmatprep.mubr.f32.mxu0 0.0
        %1180 = vmatmul.mubr.f32.gmra.mrb[0].mxu0 %v461
        %v1181 = vpop.f32.mrb[0].mxu0
        %v1182 = vadd.f32 %v1113, %v1181
        %v1183 = vpop.f32.mrb[0].mxu0
        %1184 = vmatprep.mubr.f32.mxu0 0.0
        %1185 = vmatmul.mubr.f32.gmra.mrb[0].mxu0 %v464
        %v1186 = vpop.f32.mrb[0].mxu0
        %v1187 = vadd.f32 %v1113, %v1186
        %v1188 = vpop.f32.mrb[0].mxu0
        %1189 = vmatprep.mubr.f32.mxu0 0.0
        %1190 = vmatmul.mubr.f32.gmra.mrb[0].mxu0 %v467
        %v1191 = vpop.f32.mrb[0].mxu0
        %v1192 = vadd.f32 %v1113, %v1191
        %v1193 = vpop.f32.mrb[0].mxu0
        %1194 = vmatprep.mubr.f32.mxu0 0.0
        %1195 = vmatmul.mubr.f32.gmra.mrb[0].mxu0 %v470
        %v1196 = vpop.f32.mrb[0].mxu0
        %v1197 = vadd.f32 %v1113, %v1196
        %v1198 = vpop.f32.mrb[0].mxu0
        %1199 = vmatprep.mubr.f32.mxu0 0.0
        %1200 = vmatmul.mubr.f32.gmra.mrb[0].mxu0 %v473
        %v1201 = vpop.f32.mrb[0].mxu0
        %v1202 = vadd.f32 %v1113, %v1201
        %v1203 = vpop.f32.mrb[0].mxu0
        %1204 = vmatprep.mubr.f32.mxu0 0.0
        %1205 = vmatmul.mubr.f32.gmra.mrb[0].mxu0 %v476
        %v1206 = vpop.f32.mrb[0].mxu0
        %v1207 = vadd.f32 %v1113, %v1206
        %v1208 = vpop.f32.mrb[0].mxu0
        %1209 = vmatprep.mubr.f32.mxu0 0.0
        %1210 = vmatmul.mubr.f32.gmra.mrb[0].mxu0 %v479
        %v1211 = vpop.f32.mrb[0].mxu0
        %v1212 = vadd.f32 %v1113, %v1211
        %v1213 = vpop.f32.mrb[0].mxu0
        %1214 = vmatprep.mubr.f32.mxu0 0.0
        %1215 = vmatmul.mubr.f32.gmra.mrb[0].mxu0 %v482
        %v1216 = vpop.f32.mrb[0].mxu0
        %v1217 = vadd.f32 %v1113, %v1216
        %v1218 = vpop.f32.mrb[0].mxu0
        %1219 = vmatprep.mubr.f32.mxu0 0.0
        %1220 = vmatmul.mubr.f32.gmra.mrb[0].mxu0 %v485
        %v1221 = vpop.f32.mrb[0].mxu0
        %v1222 = vadd.f32 %v1113, %v1221
        %v1223 = vpop.f32.mrb[0].mxu0
        %1224 = vmatprep.mubr.f32.mxu0 0.0
        %1225 = vmatmul.mubr.f32.gmra.mrb[0].mxu0 %v488
        %v1226 = vpop.f32.mrb[0].mxu0
        %v1227 = vadd.f32 %v1113, %v1226
        %v1228 = vpop.f32.mrb[0].mxu0
        %1229 = vmatprep.mubr.f32.mxu0 0.0
        %1230 = vmatmul.mubr.f32.gmra.mrb[0].mxu0 %v491
        %v1231 = vpop.f32.mrb[0].mxu0
        %v1232 = vadd.f32 %v1113, %v1231
        %v1233 = vpop.f32.mrb[0].mxu0
        %1234 = vmatprep.mubr.f32.mxu0 0.0
        %1235 = vmatmul.mubr.f32.gmra.mrb[0].mxu0 %v494
        %v1236 = vpop.f32.mrb[0].mxu0
        %v1237 = vadd.f32 %v1113, %v1236
        %v1238 = vpop.f32.mrb[0].mxu0
        %1239 = vmatprep.mubr.f32.mxu0 0.0
        %1240 = vmatmul.mubr.f32.gmra.mrb[0].mxu0 %v497
        %v1241 = vpop.f32.mrb[0].mxu0
        %v1242 = vadd.f32 %v1113, %v1241
        %v1243 = vpop.f32.mrb[0].mxu0
        %1244 = vmatprep.mubr.f32.mxu0 0.0
        %1245 = vmatmul.mubr.f32.gmra.mrb[0].mxu0 %v500
        %v1246 = vpop.f32.mrb[0].mxu0
        %v1247 = vadd.f32 %v1113, %v1246
        %v1248 = vpop.f32.mrb[0].mxu0
        %1249 = vmatprep.mubr.f32.mxu0 0.0
        %1250 = vmatmul.mubr.f32.gmra.mrb[0].mxu0 %v503
        %v1251 = vpop.f32.mrb[0].mxu0
        %v1252 = vadd.f32 %v1113, %v1251
        %v1253 = vpop.f32.mrb[0].mxu0
        %1254 = vmatprep.mubr.f32.mxu0 0.0
        %1255 = vmatmul.mubr.f32.gmra.mrb[0].mxu0 %v506
        %v1256 = vpop.f32.mrb[0].mxu0
        %v1257 = vadd.f32 %v1113, %v1256
        %v1258 = vpop.f32.mrb[0].mxu0
        %1259 = vmatprep.mubr.f32.mxu0 0.0
        %1260 = vmatmul.mubr.f32.gmra.mrb[0].mxu0 %v509
        %v1261 = vpop.f32.mrb[0].mxu0
        %v1262 = vadd.f32 %v1113, %v1261
        %v1263 = vpop.f32.mrb[0].mxu0
        %1264 = vmatprep.mubr.f32.mxu0 0.0
        %1265 = vmatmul.mubr.f32.gmra.mrb[0].mxu0 %v512
        %v1266 = vpop.f32.mrb[0].mxu0
        %v1267 = vadd.f32 %v1113, %v1266
        %v1268 = vpop.f32.mrb[0].mxu0
        %1269 = vmatprep.mubr.f32.mxu0 0.0
        %1270 = vmatmul.mubr.f32.gmra.mrb[0].mxu0 %v515
        %v1271 = vpop.f32.mrb[0].mxu0
        %v1272 = vadd.f32 %v1113, %v1271
        %v1273 = vpop.f32.mrb[0].mxu0
        %1274 = vmatprep.mubr.f32.mxu0 0.0
        %1275 = vmatmul.mubr.f32.gmra.mrb[0].mxu0 %v518
        %v1276 = vpop.f32.mrb[0].mxu0
        %v1277 = vadd.f32 %v1113, %v1276
        %v1278 = vpop.f32.mrb[0].mxu0
        %1279 = vmatprep.mubr.f32.mxu0 0.0
        %1280 = vmatmul.mubr.f32.gmra.mrb[0].mxu0 %v521
        %v1281 = vpop.f32.mrb[0].mxu0
        %v1282 = vadd.f32 %v1113, %v1281
        %v1283 = vpop.f32.mrb[0].mxu0
        %1284 = vmatprep.mubr.f32.mxu0 0.0
        %1285 = vmatmul.mubr.f32.gmra.mrb[0].mxu0 %v524
        %v1286 = vpop.f32.mrb[0].mxu0
        %v1287 = vadd.f32 %v1113, %v1286
        %v1288 = vpop.f32.mrb[0].mxu0
        %1289 = vmatprep.mubr.f32.mxu0 0.0
        %1290 = vmatmul.mubr.f32.gmra.mrb[0].mxu0 %v527
        %v1291 = vpop.f32.mrb[0].mxu0
        %v1292 = vadd.f32 %v1113, %v1291
        %v1293 = vpop.f32.mrb[0].mxu0
        %1294 = vmatprep.mubr.f32.mxu0 0.0
        %1295 = vmatmul.mubr.f32.gmra.mrb[0].mxu0 %v530
        %v1296 = vpop.f32.mrb[0].mxu0
        %v1297 = vadd.f32 %v1113, %v1296
        %v1298 = vpop.f32.mrb[0].mxu0
        %1299 = vmatprep.mubr.f32.mxu0 0.0
        %1300 = vmatmul.mubr.f32.gmra.mrb[0].mxu0 %v533
        %v1301 = vpop.f32.mrb[0].mxu0
        %v1302 = vadd.f32 %v1113, %v1301
        %v1303 = vpop.f32.mrb[0].mxu0
        %1304 = vmatprep.mubr.f32.mxu0 0.0
        %1305 = vmatmul.mubr.f32.gmra.mrb[0].mxu0 %v536
        %v1306 = vpop.f32.mrb[0].mxu0
        %v1307 = vadd.f32 %v1113, %v1306
        %v1308 = vpop.f32.mrb[0].mxu0
        %1309 = vmatprep.mubr.f32.mxu0 0.0
        %1310 = vmatmul.mubr.f32.gmra.mrb[0].mxu0 %v539
        %v1311 = vpop.f32.mrb[0].mxu0
        %v1312 = vadd.f32 %v1113, %v1311
        %v1313 = vpop.f32.mrb[0].mxu0
        %1314 = vmatprep.mubr.f32.mxu0 0.0
        %1315 = vmatmul.mubr.f32.gmra.mrb[0].mxu0 %v542
        %v1316 = vpop.f32.mrb[0].mxu0
        %v1317 = vadd.f32 %v1113, %v1316
        %v1318 = vpop.f32.mrb[0].mxu0
        %1319 = vmatprep.mubr.f32.mxu0 0.0
        %1320 = vmatmul.mubr.f32.gmra.mrb[0].mxu0 %v545
        %v1321 = vpop.f32.mrb[0].mxu0
        %v1322 = vadd.f32 %v1113, %v1321
        %v1323 = vpop.f32.mrb[0].mxu0
        %1324 = vmatprep.mubr.f32.mxu0 0.0
        %1325 = vmatmul.mubr.f32.gmra.mrb[0].mxu0 %v548
        %v1326 = vpop.f32.mrb[0].mxu0
        %v1327 = vadd.f32 %v1113, %v1326
        %v1328 = vpop.f32.mrb[0].mxu0
        %1329 = vmatprep.mubr.f32.mxu0 0.0
        %1330 = vmatmul.mubr.f32.gmra.mrb[0].mxu0 %v551
        %v1331 = vpop.f32.mrb[0].mxu0
        %v1332 = vadd.f32 %v1113, %v1331
        %v1333 = vpop.f32.mrb[0].mxu0
        %1334 = vmatprep.mubr.f32.mxu0 0.0
        %1335 = vmatmul.mubr.f32.gmra.mrb[0].mxu0 %v554
        %v1336 = vpop.f32.mrb[0].mxu0
        %v1337 = vadd.f32 %v1113, %v1336
        %v1338 = vpop.f32.mrb[0].mxu0
        %1339 = vdwg.mxu0
        %v1340 = vmax.f32 %v1077, 0.0
        %v1341 = vmax.f32 %v1078, 0.0
        %v1342 = vmax.f32 %v1079, 0.0
        %v1343 = vmax.f32 %v1080, 0.0
        %v1344 = vmax.f32 %v1081, 0.0
        %v1345 = vmax.f32 %v1082, 0.0
        %v1346 = vmax.f32 %v1083, 0.0
        %v1347 = vmax.f32 %v1084, 0.0
        %v1348 = vmax.f32 %v1085, 0.0
        %v1349 = vmax.f32 %v1086, 0.0
        %v1350 = vmax.f32 %v1087, 0.0
        %v1351 = vmax.f32 %v1088, 0.0
        %v1352 = vmax.f32 %v1089, 0.0
        %v1353 = vmax.f32 %v1090, 0.0
        %v1354 = vmax.f32 %v1091, 0.0
        %v1355 = vmax.f32 %v1092, 0.0
        %v1356 = vmax.f32 %v1093, 0.0
        %v1357 = vmax.f32 %v1094, 0.0
        %v1358 = vmax.f32 %v1095, 0.0
        %v1359 = vmax.f32 %v1096, 0.0
        %v1360 = vmax.f32 %v1097, 0.0
        %v1361 = vmax.f32 %v1098, 0.0
        %v1362 = vmax.f32 %v1099, 0.0
        %v1363 = vmax.f32 %v1100, 0.0
        %v1364 = vmax.f32 %v1101, 0.0
        %v1365 = vmax.f32 %v1102, 0.0
        %v1366 = vmax.f32 %v1103, 0.0
        %v1367 = vmax.f32 %v1104, 0.0
        %v1368 = vmax.f32 %v1105, 0.0
        %v1369 = vmax.f32 %v1106, 0.0
        %v1370 = vmax.f32 %v1107, 0.0
        %v1371 = vmax.f32 %v1108, 0.0
        %v1372 = vmax.f32 %v1182, 0.0
        %v1373 = vmax.f32 %v1187, 0.0
        %v1374 = vmax.f32 %v1192, 0.0
        %v1375 = vmax.f32 %v1197, 0.0
        %v1376 = vmax.f32 %v1202, 0.0
        %v1377 = vmax.f32 %v1207, 0.0
        %v1378 = vmax.f32 %v1212, 0.0
        %v1379 = vmax.f32 %v1217, 0.0
        %v1380 = vmax.f32 %v1222, 0.0
        %v1381 = vmax.f32 %v1227, 0.0
        %v1382 = vmax.f32 %v1232, 0.0
        %v1383 = vmax.f32 %v1237, 0.0
        %v1384 = vmax.f32 %v1242, 0.0
        %v1385 = vmax.f32 %v1247, 0.0
        %v1386 = vmax.f32 %v1252, 0.0
        %v1387 = vmax.f32 %v1257, 0.0
        %v1388 = vmax.f32 %v1262, 0.0
        %v1389 = vmax.f32 %v1267, 0.0
        %v1390 = vmax.f32 %v1272, 0.0
        %v1391 = vmax.f32 %v1277, 0.0
        %v1392 = vmax.f32 %v1282, 0.0
        %v1393 = vmax.f32 %v1287, 0.0
        %v1394 = vmax.f32 %v1292, 0.0
        %v1395 = vmax.f32 %v1297, 0.0
        %v1396 = vmax.f32 %v1302, 0.0
        %v1397 = vmax.f32 %v1307, 0.0
        %v1398 = vmax.f32 %v1312, 0.0
        %v1399 = vmax.f32 %v1317, 0.0
        %v1400 = vmax.f32 %v1322, 0.0
        %v1401 = vmax.f32 %v1327, 0.0
        %v1402 = vmax.f32 %v1332, 0.0
        %v1403 = vmax.f32 %v1337, 0.0
        %v1404 = vld [vmem:[%s6] sm:$0xff]
        %v1405 = vld [vmem:[%s6 + $0x8] sm:$0xff]
        %v1406 = vld [vmem:[%s6 + $0x10] sm:$0xff]
        %v1407 = vld [vmem:[%s6 + $0x18] sm:$0xff]
        %v1408 = vld [vmem:[%s7] sm:$0x1]
        %v1409 = vld [vmem:[%s8] sm:$0xff]
        %v1410 = vld [vmem:[%s8 + $0x8] sm:$0xff]
        %v1411 = vld [vmem:[%s8 + $0x10] sm:$0xff]
        %v1412 = vld [vmem:[%s8 + $0x18] sm:$0xff]
        %v1413 = vld [vmem:[%s9] sm:$0x1]
        %vm1414 = vcmask 261120
        %v1416 = vsel %vm1414, %v1340, 0
        %v1419 = vsel %vm1414, %v1341, 0
        %v1422 = vsel %vm1414, %v1342, 0
        %v1425 = vsel %vm1414, %v1343, 0
        %v1428 = vsel %vm1414, %v1344, 0
        %v1431 = vsel %vm1414, %v1345, 0
        %v1434 = vsel %vm1414, %v1346, 0
        %v1437 = vsel %vm1414, %v1347, 0
        %v1440 = vsel %vm1414, %v1348, 0
        %v1443 = vsel %vm1414, %v1349, 0
        %v1446 = vsel %vm1414, %v1350, 0
        %v1449 = vsel %vm1414, %v1351, 0
        %v1452 = vsel %vm1414, %v1352, 0
        %v1455 = vsel %vm1414, %v1353, 0
        %v1458 = vsel %vm1414, %v1354, 0
        %v1461 = vsel %vm1414, %v1355, 0
        %v1464 = vsel %vm1414, %v1356, 0
        %v1467 = vsel %vm1414, %v1357, 0
        %v1470 = vsel %vm1414, %v1358, 0
        %v1473 = vsel %vm1414, %v1359, 0
        %v1476 = vsel %vm1414, %v1360, 0
        %v1479 = vsel %vm1414, %v1361, 0
        %v1482 = vsel %vm1414, %v1362, 0
        %v1485 = vsel %vm1414, %v1363, 0
        %v1488 = vsel %vm1414, %v1364, 0
        %v1491 = vsel %vm1414, %v1365, 0
        %v1494 = vsel %vm1414, %v1366, 0
        %v1497 = vsel %vm1414, %v1367, 0
        %v1500 = vsel %vm1414, %v1368, 0
        %v1503 = vsel %vm1414, %v1369, 0
        %v1506 = vsel %vm1414, %v1370, 0
        %v1509 = vsel %vm1414, %v1371, 0
        %1511 = vmatprep.subr.mxu0 0.0
        %1512 = vmatpush1.msra.mxu0 %v1404
        %1513 = vmatprep.subr.mxu0 0.0
        %1514 = vmatpush1.msra.mxu0 %v1405
        %1515 = vmatprep.subr.mxu0 0.0
        %1516 = vmatpush1.msra.mxu0 %v1406
        %1517 = vmatprep.subr.mxu0 0.0
        %1518 = vmatpush1.msra.mxu0 %v1407
        %1519 = vmatprep.subr.mxu0 0.0
        %1520 = vmatpush1.msra.mxu0 0.0
        %1521 = vmatprep.subr.mxu0 0.0
        %1522 = vmatpush1.msra.mxu0 0.0
        %1523 = vmatprep.subr.mxu0 0.0
        %1524 = vmatpush1.msra.mxu0 0.0
        %1525 = vmatprep.subr.mxu0 0.0
        %1526 = vmatpush1.msra.mxu0 0.0
        %1527 = vmatprep.subr.mxu0 0.0
        %1528 = vmatpush1.msra.mxu0 0.0
        %1529 = vmatprep.subr.mxu0 0.0
        %1530 = vmatpush1.msra.mxu0 0.0
        %1531 = vmatprep.subr.mxu0 0.0
        %1532 = vmatpush1.msra.mxu0 0.0
        %1533 = vmatprep.subr.mxu0 0.0
        %1534 = vmatpush1.msra.mxu0 0.0
        %1535 = vmatprep.subr.mxu0 0.0
        %1536 = vmatpush1.msra.mxu0 0.0
        %1537 = vmatprep.subr.mxu0 0.0
        %1538 = vmatpush1.msra.mxu0 0.0
        %1539 = vmatprep.subr.mxu0 0.0
        %1540 = vmatpush1.msra.mxu0 0.0
        %1541 = vmatprep.subr.mxu0 0.0
        %1542 = vmatpush1.msra.mxu0 0.0
        %1543 = vmatprep.subr.mxu0 0.0
        %1544 = vmatpush1.msra.mxu0 0.0
        %1545 = vmatprep.subr.mxu0 0.0
        %1546 = vmatpush1.msra.mxu0 0.0
        %1547 = vmatprep.subr.mxu0 0.0
        %1548 = vmatpush1.msra.mxu0 0.0
        %1549 = vmatprep.subr.mxu0 0.0
        %1550 = vmatpush1.msra.mxu0 0.0
        %1551 = vmatprep.subr.mxu0 0.0
        %1552 = vmatpush1.msra.mxu0 0.0
        %1553 = vmatprep.subr.mxu0 0.0
        %1554 = vmatpush1.msra.mxu0 0.0
        %1555 = vmatprep.subr.mxu0 0.0
        %1556 = vmatpush1.msra.mxu0 0.0
        %1557 = vmatprep.subr.mxu0 0.0
        %1558 = vmatpush1.msra.mxu0 0.0
        %1559 = vmatprep.subr.mxu0 0.0
        %1560 = vmatpush1.msra.mxu0 0.0
        %1561 = vmatprep.subr.mxu0 0.0
        %1562 = vmatpush1.msra.mxu0 0.0
        %1563 = vmatprep.subr.mxu0 0.0
        %1564 = vmatpush1.msra.mxu0 0.0
        %1565 = vmatprep.subr.mxu0 0.0
        %1566 = vmatpush1.msra.mxu0 0.0
        %1567 = vmatprep.subr.mxu0 0.0
        %1568 = vmatpush1.msra.mxu0 0.0
        %1569 = vmatprep.subr.mxu0 0.0
        %1570 = vmatpush1.msra.mxu0 0.0
        %1571 = vmatprep.subr.mxu0 0.0
        %1572 = vmatpush1.msra.mxu0 0.0
        %1573 = vmatprep.subr.mxu0 0.0
        %1574 = vmatpush1.msra.mxu0 0.0
        %1575 = vmatprep.mubr.f32.mxu0 0.0
        %1576 = vmatmul.mubr.f32.gmra.mrb[0].mxu0 %v1416
        %v1577 = vpop.f32.mrb[0].mxu0
        %v1578 = vadd.f32 0.0, %v1577
        %v1579 = vpop.f32.mrb[0].mxu0
        %1580 = vmatprep.mubr.f32.mxu0 0.0
        %1581 = vmatmul.mubr.f32.gmra.mrb[0].mxu0 %v1419
        %v1582 = vpop.f32.mrb[0].mxu0
        %v1583 = vadd.f32 0.0, %v1582
        %v1584 = vpop.f32.mrb[0].mxu0
        %1585 = vmatprep.mubr.f32.mxu0 0.0
        %1586 = vmatmul.mubr.f32.gmra.mrb[0].mxu0 %v1422
        %v1587 = vpop.f32.mrb[0].mxu0
        %v1588 = vadd.f32 0.0, %v1587
        %v1589 = vpop.f32.mrb[0].mxu0
        %1590 = vmatprep.mubr.f32.mxu0 0.0
        %1591 = vmatmul.mubr.f32.gmra.mrb[0].mxu0 %v1425
        %v1592 = vpop.f32.mrb[0].mxu0
        %v1593 = vadd.f32 0.0, %v1592
        %v1594 = vpop.f32.mrb[0].mxu0
        %1595 = vmatprep.mubr.f32.mxu0 0.0
        %1596 = vmatmul.mubr.f32.gmra.mrb[0].mxu0 %v1428
        %v1597 = vpop.f32.mrb[0].mxu0
        %v1598 = vadd.f32 0.0, %v1597
        %v1599 = vpop.f32.mrb[0].mxu0
        %1600 = vmatprep.mubr.f32.mxu0 0.0
        %1601 = vmatmul.mubr.f32.gmra.mrb[0].mxu0 %v1431
        %v1602 = vpop.f32.mrb[0].mxu0
        %v1603 = vadd.f32 0.0, %v1602
        %v1604 = vpop.f32.mrb[0].mxu0
        %1605 = vmatprep.mubr.f32.mxu0 0.0
        %1606 = vmatmul.mubr.f32.gmra.mrb[0].mxu0 %v1434
        %v1607 = vpop.f32.mrb[0].mxu0
        %v1608 = vadd.f32 0.0, %v1607
        %v1609 = vpop.f32.mrb[0].mxu0
        %1610 = vmatprep.mubr.f32.mxu0 0.0
        %1611 = vmatmul.mubr.f32.gmra.mrb[0].mxu0 %v1437
        %v1612 = vpop.f32.mrb[0].mxu0
        %v1613 = vadd.f32 0.0, %v1612
        %v1614 = vpop.f32.mrb[0].mxu0
        %1615 = vmatprep.mubr.f32.mxu0 0.0
        %1616 = vmatmul.mubr.f32.gmra.mrb[0].mxu0 %v1440
        %v1617 = vpop.f32.mrb[0].mxu0
        %v1618 = vadd.f32 0.0, %v1617
        %v1619 = vpop.f32.mrb[0].mxu0
        %1620 = vmatprep.mubr.f32.mxu0 0.0
        %1621 = vmatmul.mubr.f32.gmra.mrb[0].mxu0 %v1443
        %v1622 = vpop.f32.mrb[0].mxu0
        %v1623 = vadd.f32 0.0, %v1622
        %v1624 = vpop.f32.mrb[0].mxu0
        %1625 = vmatprep.mubr.f32.mxu0 0.0
        %1626 = vmatmul.mubr.f32.gmra.mrb[0].mxu0 %v1446
        %v1627 = vpop.f32.mrb[0].mxu0
        %v1628 = vadd.f32 0.0, %v1627
        %v1629 = vpop.f32.mrb[0].mxu0
        %1630 = vmatprep.mubr.f32.mxu0 0.0
        %1631 = vmatmul.mubr.f32.gmra.mrb[0].mxu0 %v1449
        %v1632 = vpop.f32.mrb[0].mxu0
        %v1633 = vadd.f32 0.0, %v1632
        %v1634 = vpop.f32.mrb[0].mxu0
        %1635 = vmatprep.mubr.f32.mxu0 0.0
        %1636 = vmatmul.mubr.f32.gmra.mrb[0].mxu0 %v1452
        %v1637 = vpop.f32.mrb[0].mxu0
        %v1638 = vadd.f32 0.0, %v1637
        %v1639 = vpop.f32.mrb[0].mxu0
        %1640 = vmatprep.mubr.f32.mxu0 0.0
        %1641 = vmatmul.mubr.f32.gmra.mrb[0].mxu0 %v1455
        %v1642 = vpop.f32.mrb[0].mxu0
        %v1643 = vadd.f32 0.0, %v1642
        %v1644 = vpop.f32.mrb[0].mxu0
        %1645 = vmatprep.mubr.f32.mxu0 0.0
        %1646 = vmatmul.mubr.f32.gmra.mrb[0].mxu0 %v1458
        %v1647 = vpop.f32.mrb[0].mxu0
        %v1648 = vadd.f32 0.0, %v1647
        %v1649 = vpop.f32.mrb[0].mxu0
        %1650 = vmatprep.mubr.f32.mxu0 0.0
        %1651 = vmatmul.mubr.f32.gmra.mrb[0].mxu0 %v1461
        %v1652 = vpop.f32.mrb[0].mxu0
        %v1653 = vadd.f32 0.0, %v1652
        %v1654 = vpop.f32.mrb[0].mxu0
        %1655 = vmatprep.mubr.f32.mxu0 0.0
        %1656 = vmatmul.mubr.f32.gmra.mrb[0].mxu0 %v1464
        %v1657 = vpop.f32.mrb[0].mxu0
        %v1658 = vadd.f32 0.0, %v1657
        %v1659 = vpop.f32.mrb[0].mxu0
        %1660 = vmatprep.mubr.f32.mxu0 0.0
        %1661 = vmatmul.mubr.f32.gmra.mrb[0].mxu0 %v1467
        %v1662 = vpop.f32.mrb[0].mxu0
        %v1663 = vadd.f32 0.0, %v1662
        %v1664 = vpop.f32.mrb[0].mxu0
        %1665 = vmatprep.mubr.f32.mxu0 0.0
        %1666 = vmatmul.mubr.f32.gmra.mrb[0].mxu0 %v1470
        %v1667 = vpop.f32.mrb[0].mxu0
        %v1668 = vadd.f32 0.0, %v1667
        %v1669 = vpop.f32.mrb[0].mxu0
        %1670 = vmatprep.mubr.f32.mxu0 0.0
        %1671 = vmatmul.mubr.f32.gmra.mrb[0].mxu0 %v1473
        %v1672 = vpop.f32.mrb[0].mxu0
        %v1673 = vadd.f32 0.0, %v1672
        %v1674 = vpop.f32.mrb[0].mxu0
        %1675 = vmatprep.mubr.f32.mxu0 0.0
        %1676 = vmatmul.mubr.f32.gmra.mrb[0].mxu0 %v1476
        %v1677 = vpop.f32.mrb[0].mxu0
        %v1678 = vadd.f32 0.0, %v1677
        %v1679 = vpop.f32.mrb[0].mxu0
        %1680 = vmatprep.mubr.f32.mxu0 0.0
        %1681 = vmatmul.mubr.f32.gmra.mrb[0].mxu0 %v1479
        %v1682 = vpop.f32.mrb[0].mxu0
        %v1683 = vadd.f32 0.0, %v1682
        %v1684 = vpop.f32.mrb[0].mxu0
        %1685 = vmatprep.mubr.f32.mxu0 0.0
        %1686 = vmatmul.mubr.f32.gmra.mrb[0].mxu0 %v1482
        %v1687 = vpop.f32.mrb[0].mxu0
        %v1688 = vadd.f32 0.0, %v1687
        %v1689 = vpop.f32.mrb[0].mxu0
        %1690 = vmatprep.mubr.f32.mxu0 0.0
        %1691 = vmatmul.mubr.f32.gmra.mrb[0].mxu0 %v1485
        %v1692 = vpop.f32.mrb[0].mxu0
        %v1693 = vadd.f32 0.0, %v1692
        %v1694 = vpop.f32.mrb[0].mxu0
        %1695 = vmatprep.mubr.f32.mxu0 0.0
        %1696 = vmatmul.mubr.f32.gmra.mrb[0].mxu0 %v1488
        %v1697 = vpop.f32.mrb[0].mxu0
        %v1698 = vadd.f32 0.0, %v1697
        %v1699 = vpop.f32.mrb[0].mxu0
        %1700 = vmatprep.mubr.f32.mxu0 0.0
        %1701 = vmatmul.mubr.f32.gmra.mrb[0].mxu0 %v1491
        %v1702 = vpop.f32.mrb[0].mxu0
        %v1703 = vadd.f32 0.0, %v1702
        %v1704 = vpop.f32.mrb[0].mxu0
        %1705 = vmatprep.mubr.f32.mxu0 0.0
        %1706 = vmatmul.mubr.f32.gmra.mrb[0].mxu0 %v1494
        %v1707 = vpop.f32.mrb[0].mxu0
        %v1708 = vadd.f32 0.0, %v1707
        %v1709 = vpop.f32.mrb[0].mxu0
        %1710 = vmatprep.mubr.f32.mxu0 0.0
        %1711 = vmatmul.mubr.f32.gmra.mrb[0].mxu0 %v1497
        %v1712 = vpop.f32.mrb[0].mxu0
        %v1713 = vadd.f32 0.0, %v1712
        %v1714 = vpop.f32.mrb[0].mxu0
        %1715 = vmatprep.mubr.f32.mxu0 0.0
        %1716 = vmatmul.mubr.f32.gmra.mrb[0].mxu0 %v1500
        %v1717 = vpop.f32.mrb[0].mxu0
        %v1718 = vadd.f32 0.0, %v1717
        %v1719 = vpop.f32.mrb[0].mxu0
        %1720 = vmatprep.mubr.f32.mxu0 0.0
        %1721 = vmatmul.mubr.f32.gmra.mrb[0].mxu0 %v1503
        %v1722 = vpop.f32.mrb[0].mxu0
        %v1723 = vadd.f32 0.0, %v1722
        %v1724 = vpop.f32.mrb[0].mxu0
        %1725 = vmatprep.mubr.f32.mxu0 0.0
        %1726 = vmatmul.mubr.f32.gmra.mrb[0].mxu0 %v1506
        %v1727 = vpop.f32.mrb[0].mxu0
        %v1728 = vadd.f32 0.0, %v1727
        %v1729 = vpop.f32.mrb[0].mxu0
        %1730 = vmatprep.mubr.f32.mxu0 0.0
        %1731 = vmatmul.mubr.f32.gmra.mrb[0].mxu0 %v1509
        %v1732 = vpop.f32.mrb[0].mxu0
        %v1733 = vadd.f32 0.0, %v1732
        %v1734 = vpop.f32.mrb[0].mxu0
        %1735 = vdwg.mxu0
        %1736 = vmatprep.subr.mxu0 0.0
        %1737 = vmatpush1.msra.mxu0 %v1578
        %1738 = vmatprep.subr.mxu0 0.0
        %1739 = vmatpush1.msra.mxu0 %v1583
        %1740 = vmatprep.subr.mxu0 0.0
        %1741 = vmatpush1.msra.mxu0 %v1588
        %1742 = vmatprep.subr.mxu0 0.0
        %1743 = vmatpush1.msra.mxu0 %v1593
        %1744 = vmatprep.subr.mxu0 0.0
        %1745 = vmatpush1.msra.mxu0 %v1598
        %1746 = vmatprep.subr.mxu0 0.0
        %1747 = vmatpush1.msra.mxu0 %v1603
        %1748 = vmatprep.subr.mxu0 0.0
        %1749 = vmatpush1.msra.mxu0 %v1608
        %1750 = vmatprep.subr.mxu0 0.0
        %1751 = vmatpush1.msra.mxu0 %v1613
        %1752 = vmatprep.subr.mxu0 0.0
        %1753 = vmatpush1.msra.mxu0 %v1618
        %1754 = vmatprep.subr.mxu0 0.0
        %1755 = vmatpush1.msra.mxu0 %v1623
        %1756 = vmatprep.subr.mxu0 0.0
        %1757 = vmatpush1.msra.mxu0 %v1628
        %1758 = vmatprep.subr.mxu0 0.0
        %1759 = vmatpush1.msra.mxu0 %v1633
        %1760 = vmatprep.subr.mxu0 0.0
        %1761 = vmatpush1.msra.mxu0 %v1638
        %1762 = vmatprep.subr.mxu0 0.0
        %1763 = vmatpush1.msra.mxu0 %v1643
        %1764 = vmatprep.subr.mxu0 0.0
        %1765 = vmatpush1.msra.mxu0 %v1648
        %1766 = vmatprep.subr.mxu0 0.0
        %1767 = vmatpush1.msra.mxu0 %v1653
        %1768 = vmatprep.subr.mxu0 0.0
        %1769 = vmatpush1.msra.mxu0 0.0
        %1770 = vmatprep.subr.mxu0 0.0
        %1771 = vmatpush1.msra.mxu0 0.0
        %1772 = vmatprep.subr.mxu0 0.0
        %1773 = vmatpush1.msra.mxu0 0.0
        %1774 = vmatprep.subr.mxu0 0.0
        %1775 = vmatpush1.msra.mxu0 0.0
        %1776 = vmatprep.subr.mxu0 0.0
        %1777 = vmatpush1.msra.mxu0 0.0
        %1778 = vmatprep.subr.mxu0 0.0
        %1779 = vmatpush1.msra.mxu0 0.0
        %1780 = vmatprep.subr.mxu0 0.0
        %1781 = vmatpush1.msra.mxu0 0.0
        %1782 = vmatprep.subr.mxu0 0.0
        %1783 = vmatpush1.msra.mxu0 0.0
        %1784 = vmatprep.subr.mxu0 0.0
        %1785 = vmatpush1.msra.mxu0 0.0
        %1786 = vmatprep.subr.mxu0 0.0
        %1787 = vmatpush1.msra.mxu0 0.0
        %1788 = vmatprep.subr.mxu0 0.0
        %1789 = vmatpush1.msra.mxu0 0.0
        %1790 = vmatprep.subr.mxu0 0.0
        %1791 = vmatpush1.msra.mxu0 0.0
        %1792 = vmatprep.subr.mxu0 0.0
        %1793 = vmatpush1.msra.mxu0 0.0
        %1794 = vmatprep.subr.mxu0 0.0
        %1795 = vmatpush1.msra.mxu0 0.0
        %1796 = vmatprep.subr.mxu0 0.0
        %1797 = vmatpush1.msra.mxu0 0.0
        %1798 = vmatprep.subr.mxu0 0.0
        %1799 = vmatpush1.msra.mxu0 0.0
        %1800 = vmatprep.mubr.f32.mxu0 0.0
        %1801 = vmatmul.mubr.f32.gmra.mrb[0].mxu0 %v389
        %v1802 = vpop.f32.mrb[0].mxu0
        %v1803 = vadd.f32 0.0, %v1802
        %v1804 = vpop.f32.mrb[0].mxu0
        %1805 = vmatprep.mubr.f32.mxu0 0.0
        %1806 = vmatmul.mubr.f32.gmra.mrb[0].mxu0 %v390
        %v1807 = vpop.f32.mrb[0].mxu0
        %v1808 = vadd.f32 0.0, %v1807
        %v1809 = vpop.f32.mrb[0].mxu0
        %1810 = vmatprep.mubr.f32.mxu0 0.0
        %1811 = vmatmul.mubr.f32.gmra.mrb[0].mxu0 %v391
        %v1812 = vpop.f32.mrb[0].mxu0
        %v1813 = vadd.f32 0.0, %v1812
        %v1814 = vpop.f32.mrb[0].mxu0
        %1815 = vmatprep.mubr.f32.mxu0 0.0
        %1816 = vmatmul.mubr.f32.gmra.mrb[0].mxu0 %v392
        %v1817 = vpop.f32.mrb[0].mxu0
        %v1818 = vadd.f32 0.0, %v1817
        %v1819 = vpop.f32.mrb[0].mxu0
        %1820 = vmatprep.mubr.f32.mxu0 0.0
        %1821 = vmatmul.mubr.f32.gmra.mrb[0].mxu0 %v393
        %v1822 = vpop.f32.mrb[0].mxu0
        %v1823 = vadd.f32 0.0, %v1822
        %v1824 = vpop.f32.mrb[0].mxu0
        %1825 = vmatprep.mubr.f32.mxu0 0.0
        %1826 = vmatmul.mubr.f32.gmra.mrb[0].mxu0 %v394
        %v1827 = vpop.f32.mrb[0].mxu0
        %v1828 = vadd.f32 0.0, %v1827
        %v1829 = vpop.f32.mrb[0].mxu0
        %1830 = vmatprep.mubr.f32.mxu0 0.0
        %1831 = vmatmul.mubr.f32.gmra.mrb[0].mxu0 %v395
        %v1832 = vpop.f32.mrb[0].mxu0
        %v1833 = vadd.f32 0.0, %v1832
        %v1834 = vpop.f32.mrb[0].mxu0
        %1835 = vmatprep.mubr.f32.mxu0 0.0
        %1836 = vmatmul.mubr.f32.gmra.mrb[0].mxu0 %v396
        %v1837 = vpop.f32.mrb[0].mxu0
        %v1838 = vadd.f32 0.0, %v1837
        %v1839 = vpop.f32.mrb[0].mxu0
        %1840 = vmatprep.mubr.f32.mxu0 0.0
        %1841 = vmatmul.mubr.f32.gmra.mrb[0].mxu0 %v397
        %v1842 = vpop.f32.mrb[0].mxu0
        %v1843 = vadd.f32 0.0, %v1842
        %v1844 = vpop.f32.mrb[0].mxu0
        %1845 = vmatprep.mubr.f32.mxu0 0.0
        %1846 = vmatmul.mubr.f32.gmra.mrb[0].mxu0 %v398
        %v1847 = vpop.f32.mrb[0].mxu0
        %v1848 = vadd.f32 0.0, %v1847
        %v1849 = vpop.f32.mrb[0].mxu0
        %1850 = vmatprep.mubr.f32.mxu0 0.0
        %1851 = vmatmul.mubr.f32.gmra.mrb[0].mxu0 %v399
        %v1852 = vpop.f32.mrb[0].mxu0
        %v1853 = vadd.f32 0.0, %v1852
        %v1854 = vpop.f32.mrb[0].mxu0
        %1855 = vmatprep.mubr.f32.mxu0 0.0
        %1856 = vmatmul.mubr.f32.gmra.mrb[0].mxu0 %v400
        %v1857 = vpop.f32.mrb[0].mxu0
        %v1858 = vadd.f32 0.0, %v1857
        %v1859 = vpop.f32.mrb[0].mxu0
        %1860 = vmatprep.mubr.f32.mxu0 0.0
        %1861 = vmatmul.mubr.f32.gmra.mrb[0].mxu0 %v401
        %v1862 = vpop.f32.mrb[0].mxu0
        %v1863 = vadd.f32 0.0, %v1862
        %v1864 = vpop.f32.mrb[0].mxu0
        %1865 = vmatprep.mubr.f32.mxu0 0.0
        %1866 = vmatmul.mubr.f32.gmra.mrb[0].mxu0 %v402
        %v1867 = vpop.f32.mrb[0].mxu0
        %v1868 = vadd.f32 0.0, %v1867
        %v1869 = vpop.f32.mrb[0].mxu0
        %1870 = vmatprep.mubr.f32.mxu0 0.0
        %1871 = vmatmul.mubr.f32.gmra.mrb[0].mxu0 %v403
        %v1872 = vpop.f32.mrb[0].mxu0
        %v1873 = vadd.f32 0.0, %v1872
        %v1874 = vpop.f32.mrb[0].mxu0
        %1875 = vmatprep.mubr.f32.mxu0 0.0
        %1876 = vmatmul.mubr.f32.gmra.mrb[0].mxu0 %v404
        %v1877 = vpop.f32.mrb[0].mxu0
        %v1878 = vadd.f32 0.0, %v1877
        %v1879 = vpop.f32.mrb[0].mxu0
        %1880 = vdwg.mxu0
        %1881 = vmatprep.subr.mxu0 0.0
        %1882 = vmatpush1.msra.mxu0 %v1658
        %1883 = vmatprep.subr.mxu0 0.0
        %1884 = vmatpush1.msra.mxu0 %v1663
        %1885 = vmatprep.subr.mxu0 0.0
        %1886 = vmatpush1.msra.mxu0 %v1668
        %1887 = vmatprep.subr.mxu0 0.0
        %1888 = vmatpush1.msra.mxu0 %v1673
        %1889 = vmatprep.subr.mxu0 0.0
        %1890 = vmatpush1.msra.mxu0 %v1678
        %1891 = vmatprep.subr.mxu0 0.0
        %1892 = vmatpush1.msra.mxu0 %v1683
        %1893 = vmatprep.subr.mxu0 0.0
        %1894 = vmatpush1.msra.mxu0 %v1688
        %1895 = vmatprep.subr.mxu0 0.0
        %1896 = vmatpush1.msra.mxu0 %v1693
        %1897 = vmatprep.subr.mxu0 0.0
        %1898 = vmatpush1.msra.mxu0 %v1698
        %1899 = vmatprep.subr.mxu0 0.0
        %1900 = vmatpush1.msra.mxu0 %v1703
        %1901 = vmatprep.subr.mxu0 0.0
        %1902 = vmatpush1.msra.mxu0 %v1708
        %1903 = vmatprep.subr.mxu0 0.0
        %1904 = vmatpush1.msra.mxu0 %v1713
        %1905 = vmatprep.subr.mxu0 0.0
        %1906 = vmatpush1.msra.mxu0 %v1718
        %1907 = vmatprep.subr.mxu0 0.0
        %1908 = vmatpush1.msra.mxu0 %v1723
        %1909 = vmatprep.subr.mxu0 0.0
        %1910 = vmatpush1.msra.mxu0 %v1728
        %1911 = vmatprep.subr.mxu0 0.0
        %1912 = vmatpush1.msra.mxu0 %v1733
        %1913 = vmatprep.subr.mxu0 0.0
        %1914 = vmatpush1.msra.mxu0 0.0
        %1915 = vmatprep.subr.mxu0 0.0
        %1916 = vmatpush1.msra.mxu0 0.0
        %1917 = vmatprep.subr.mxu0 0.0
        %1918 = vmatpush1.msra.mxu0 0.0
        %1919 = vmatprep.subr.mxu0 0.0
        %1920 = vmatpush1.msra.mxu0 0.0
        %1921 = vmatprep.subr.mxu0 0.0
        %1922 = vmatpush1.msra.mxu0 0.0
        %1923 = vmatprep.subr.mxu0 0.0
        %1924 = vmatpush1.msra.mxu0 0.0
        %1925 = vmatprep.subr.mxu0 0.0
        %1926 = vmatpush1.msra.mxu0 0.0
        %1927 = vmatprep.subr.mxu0 0.0
        %1928 = vmatpush1.msra.mxu0 0.0
        %1929 = vmatprep.subr.mxu0 0.0
        %1930 = vmatpush1.msra.mxu0 0.0
        %1931 = vmatprep.subr.mxu0 0.0
        %1932 = vmatpush1.msra.mxu0 0.0
        %1933 = vmatprep.subr.mxu0 0.0
        %1934 = vmatpush1.msra.mxu0 0.0
        %1935 = vmatprep.subr.mxu0 0.0
        %1936 = vmatpush1.msra.mxu0 0.0
        %1937 = vmatprep.subr.mxu0 0.0
        %1938 = vmatpush1.msra.mxu0 0.0
        %1939 = vmatprep.subr.mxu0 0.0
        %1940 = vmatpush1.msra.mxu0 0.0
        %1941 = vmatprep.subr.mxu0 0.0
        %1942 = vmatpush1.msra.mxu0 0.0
        %1943 = vmatprep.subr.mxu0 0.0
        %1944 = vmatpush1.msra.mxu0 0.0
        %1945 = vmatprep.mubr.f32.mxu0 0.0
        %1946 = vmatmul.mubr.f32.gmra.mrb[0].mxu0 %v405
        %v1947 = vpop.f32.mrb[0].mxu0
        %v1948 = vadd.f32 0.0, %v1947
        %v1949 = vpop.f32.mrb[0].mxu0
        %1950 = vmatprep.mubr.f32.mxu0 0.0
        %1951 = vmatmul.mubr.f32.gmra.mrb[0].mxu0 %v406
        %v1952 = vpop.f32.mrb[0].mxu0
        %v1953 = vadd.f32 0.0, %v1952
        %v1954 = vpop.f32.mrb[0].mxu0
        %1955 = vmatprep.mubr.f32.mxu0 0.0
        %1956 = vmatmul.mubr.f32.gmra.mrb[0].mxu0 %v407
        %v1957 = vpop.f32.mrb[0].mxu0
        %v1958 = vadd.f32 0.0, %v1957
        %v1959 = vpop.f32.mrb[0].mxu0
        %1960 = vmatprep.mubr.f32.mxu0 0.0
        %1961 = vmatmul.mubr.f32.gmra.mrb[0].mxu0 %v408
        %v1962 = vpop.f32.mrb[0].mxu0
        %v1963 = vadd.f32 0.0, %v1962
        %v1964 = vpop.f32.mrb[0].mxu0
        %1965 = vmatprep.mubr.f32.mxu0 0.0
        %1966 = vmatmul.mubr.f32.gmra.mrb[0].mxu0 %v409
        %v1967 = vpop.f32.mrb[0].mxu0
        %v1968 = vadd.f32 0.0, %v1967
        %v1969 = vpop.f32.mrb[0].mxu0
        %1970 = vmatprep.mubr.f32.mxu0 0.0
        %1971 = vmatmul.mubr.f32.gmra.mrb[0].mxu0 %v410
        %v1972 = vpop.f32.mrb[0].mxu0
        %v1973 = vadd.f32 0.0, %v1972
        %v1974 = vpop.f32.mrb[0].mxu0
        %1975 = vmatprep.mubr.f32.mxu0 0.0
        %1976 = vmatmul.mubr.f32.gmra.mrb[0].mxu0 %v411
        %v1977 = vpop.f32.mrb[0].mxu0
        %v1978 = vadd.f32 0.0, %v1977
        %v1979 = vpop.f32.mrb[0].mxu0
        %1980 = vmatprep.mubr.f32.mxu0 0.0
        %1981 = vmatmul.mubr.f32.gmra.mrb[0].mxu0 %v412
        %v1982 = vpop.f32.mrb[0].mxu0
        %v1983 = vadd.f32 0.0, %v1982
        %v1984 = vpop.f32.mrb[0].mxu0
        %1985 = vmatprep.mubr.f32.mxu0 0.0
        %1986 = vmatmul.mubr.f32.gmra.mrb[0].mxu0 %v413
        %v1987 = vpop.f32.mrb[0].mxu0
        %v1988 = vadd.f32 0.0, %v1987
        %v1989 = vpop.f32.mrb[0].mxu0
        %1990 = vmatprep.mubr.f32.mxu0 0.0
        %1991 = vmatmul.mubr.f32.gmra.mrb[0].mxu0 %v414
        %v1992 = vpop.f32.mrb[0].mxu0
        %v1993 = vadd.f32 0.0, %v1992
        %v1994 = vpop.f32.mrb[0].mxu0
        %1995 = vmatprep.mubr.f32.mxu0 0.0
        %1996 = vmatmul.mubr.f32.gmra.mrb[0].mxu0 %v415
        %v1997 = vpop.f32.mrb[0].mxu0
        %v1998 = vadd.f32 0.0, %v1997
        %v1999 = vpop.f32.mrb[0].mxu0
        %2000 = vmatprep.mubr.f32.mxu0 0.0
        %2001 = vmatmul.mubr.f32.gmra.mrb[0].mxu0 %v416
        %v2002 = vpop.f32.mrb[0].mxu0
        %v2003 = vadd.f32 0.0, %v2002
        %v2004 = vpop.f32.mrb[0].mxu0
        %2005 = vmatprep.mubr.f32.mxu0 0.0
        %2006 = vmatmul.mubr.f32.gmra.mrb[0].mxu0 %v417
        %v2007 = vpop.f32.mrb[0].mxu0
        %v2008 = vadd.f32 0.0, %v2007
        %v2009 = vpop.f32.mrb[0].mxu0
        %2010 = vmatprep.mubr.f32.mxu0 0.0
        %2011 = vmatmul.mubr.f32.gmra.mrb[0].mxu0 %v418
        %v2012 = vpop.f32.mrb[0].mxu0
        %v2013 = vadd.f32 0.0, %v2012
        %v2014 = vpop.f32.mrb[0].mxu0
        %2015 = vmatprep.mubr.f32.mxu0 0.0
        %2016 = vmatmul.mubr.f32.gmra.mrb[0].mxu0 %v419
        %v2017 = vpop.f32.mrb[0].mxu0
        %v2018 = vadd.f32 0.0, %v2017
        %v2019 = vpop.f32.mrb[0].mxu0
        %2020 = vmatprep.mubr.f32.mxu0 0.0
        %2021 = vmatmul.mubr.f32.gmra.mrb[0].mxu0 %v420
        %v2022 = vpop.f32.mrb[0].mxu0
        %v2023 = vadd.f32 0.0, %v2022
        %v2024 = vpop.f32.mrb[0].mxu0
        %2025 = vdwg.mxu0
        %v2027 = vlaneseq
        %v2028 = vshrl.u32 %v2027, 7
        %v2029 = vsub.s32 0, %v2028
        %v2030 = vrot.slane %v1408, %v2029
        %v2032 = vadd.f32 %v1803, %v2030
        %v2033 = vadd.f32 %v1808, %v2030
        %v2034 = vadd.f32 %v1813, %v2030
        %v2035 = vadd.f32 %v1818, %v2030
        %v2036 = vadd.f32 %v1823, %v2030
        %v2037 = vadd.f32 %v1828, %v2030
        %v2038 = vadd.f32 %v1833, %v2030
        %v2039 = vadd.f32 %v1838, %v2030
        %v2040 = vadd.f32 %v1843, %v2030
        %v2041 = vadd.f32 %v1848, %v2030
        %v2042 = vadd.f32 %v1853, %v2030
        %v2043 = vadd.f32 %v1858, %v2030
        %v2044 = vadd.f32 %v1863, %v2030
        %v2045 = vadd.f32 %v1868, %v2030
        %v2046 = vadd.f32 %v1873, %v2030
        %v2047 = vadd.f32 %v1878, %v2030
        %v2048 = vadd.f32 %v1948, %v2030
        %v2049 = vadd.f32 %v1953, %v2030
        %v2050 = vadd.f32 %v1958, %v2030
        %v2051 = vadd.f32 %v1963, %v2030
        %v2052 = vadd.f32 %v1968, %v2030
        %v2053 = vadd.f32 %v1973, %v2030
        %v2054 = vadd.f32 %v1978, %v2030
        %v2055 = vadd.f32 %v1983, %v2030
        %v2056 = vadd.f32 %v1988, %v2030
        %v2057 = vadd.f32 %v1993, %v2030
        %v2058 = vadd.f32 %v1998, %v2030
        %v2059 = vadd.f32 %v2003, %v2030
        %v2060 = vadd.f32 %v2008, %v2030
        %v2061 = vadd.f32 %v2013, %v2030
        %v2062 = vadd.f32 %v2018, %v2030
        %v2063 = vadd.f32 %v2023, %v2030
        %v2065 = vlaneseq
        %v2066 = vshrl.u32 %v2065, 7
        %v2067 = vsub.s32 0, %v2066
        %v2068 = vrot.slane %v1413, %v2067
        %v2071 = vsel %vm1414, %v1372, 0
        %v2074 = vsel %vm1414, %v1373, 0
        %v2077 = vsel %vm1414, %v1374, 0
        %v2080 = vsel %vm1414, %v1375, 0
        %v2083 = vsel %vm1414, %v1376, 0
        %v2086 = vsel %vm1414, %v1377, 0
        %v2089 = vsel %vm1414, %v1378, 0
        %v2092 = vsel %vm1414, %v1379, 0
        %v2095 = vsel %vm1414, %v1380, 0
        %v2098 = vsel %vm1414, %v1381, 0
        %v2101 = vsel %vm1414, %v1382, 0
        %v2104 = vsel %vm1414, %v1383, 0
        %v2107 = vsel %vm1414, %v1384, 0
        %v2110 = vsel %vm1414, %v1385, 0
        %v2113 = vsel %vm1414, %v1386, 0
        %v2116 = vsel %vm1414, %v1387, 0
        %v2119 = vsel %vm1414, %v1388, 0
        %v2122 = vsel %vm1414, %v1389, 0
        %v2125 = vsel %vm1414, %v1390, 0
        %v2128 = vsel %vm1414, %v1391, 0
        %v2131 = vsel %vm1414, %v1392, 0
        %v2134 = vsel %vm1414, %v1393, 0
        %v2137 = vsel %vm1414, %v1394, 0
        %v2140 = vsel %vm1414, %v1395, 0
        %v2143 = vsel %vm1414, %v1396, 0
        %v2146 = vsel %vm1414, %v1397, 0
        %v2149 = vsel %vm1414, %v1398, 0
        %v2152 = vsel %vm1414, %v1399, 0
        %v2155 = vsel %vm1414, %v1400, 0
        %v2158 = vsel %vm1414, %v1401, 0
        %v2161 = vsel %vm1414, %v1402, 0
        %v2164 = vsel %vm1414, %v1403, 0
        %2166 = vmatprep.subr.mxu0 0.0
        %2167 = vmatpush1.msra.mxu0 %v1409
        %2168 = vmatprep.subr.mxu0 0.0
        %2169 = vmatpush1.msra.mxu0 %v1410
        %2170 = vmatprep.subr.mxu0 0.0
        %2171 = vmatpush1.msra.mxu0 %v1411
        %2172 = vmatprep.subr.mxu0 0.0
        %2173 = vmatpush1.msra.mxu0 %v1412
        %2174 = vmatprep.subr.mxu0 0.0
        %2175 = vmatpush1.msra.mxu0 0.0
        %2176 = vmatprep.subr.mxu0 0.0
        %2177 = vmatpush1.msra.mxu0 0.0
        %2178 = vmatprep.subr.mxu0 0.0
        %2179 = vmatpush1.msra.mxu0 0.0
        %2180 = vmatprep.subr.mxu0 0.0
        %2181 = vmatpush1.msra.mxu0 0.0
        %2182 = vmatprep.subr.mxu0 0.0
        %2183 = vmatpush1.msra.mxu0 0.0
        %2184 = vmatprep.subr.mxu0 0.0
        %2185 = vmatpush1.msra.mxu0 0.0
        %2186 = vmatprep.subr.mxu0 0.0
        %2187 = vmatpush1.msra.mxu0 0.0
        %2188 = vmatprep.subr.mxu0 0.0
        %2189 = vmatpush1.msra.mxu0 0.0
        %2190 = vmatprep.subr.mxu0 0.0
        %2191 = vmatpush1.msra.mxu0 0.0
        %2192 = vmatprep.subr.mxu0 0.0
        %2193 = vmatpush1.msra.mxu0 0.0
        %2194 = vmatprep.subr.mxu0 0.0
        %2195 = vmatpush1.msra.mxu0 0.0
        %2196 = vmatprep.subr.mxu0 0.0
        %2197 = vmatpush1.msra.mxu0 0.0
        %2198 = vmatprep.subr.mxu0 0.0
        %2199 = vmatpush1.msra.mxu0 0.0
        %2200 = vmatprep.subr.mxu0 0.0
        %2201 = vmatpush1.msra.mxu0 0.0
        %2202 = vmatprep.subr.mxu0 0.0
        %2203 = vmatpush1.msra.mxu0 0.0
        %2204 = vmatprep.subr.mxu0 0.0
        %2205 = vmatpush1.msra.mxu0 0.0
        %2206 = vmatprep.subr.mxu0 0.0
        %2207 = vmatpush1.msra.mxu0 0.0
        %2208 = vmatprep.subr.mxu0 0.0
        %2209 = vmatpush1.msra.mxu0 0.0
        %2210 = vmatprep.subr.mxu0 0.0
        %2211 = vmatpush1.msra.mxu0 0.0
        %2212 = vmatprep.subr.mxu0 0.0
        %2213 = vmatpush1.msra.mxu0 0.0
        %2214 = vmatprep.subr.mxu0 0.0
        %2215 = vmatpush1.msra.mxu0 0.0
        %2216 = vmatprep.subr.mxu0 0.0
        %2217 = vmatpush1.msra.mxu0 0.0
        %2218 = vmatprep.subr.mxu0 0.0
        %2219 = vmatpush1.msra.mxu0 0.0
        %2220 = vmatprep.subr.mxu0 0.0
        %2221 = vmatpush1.msra.mxu0 0.0
        %2222 = vmatprep.subr.mxu0 0.0
        %2223 = vmatpush1.msra.mxu0 0.0
        %2224 = vmatprep.subr.mxu0 0.0
        %2225 = vmatpush1.msra.mxu0 0.0
        %2226 = vmatprep.subr.mxu0 0.0
        %2227 = vmatpush1.msra.mxu0 0.0
        %2228 = vmatprep.subr.mxu0 0.0
        %2229 = vmatpush1.msra.mxu0 0.0
        %2230 = vmatprep.mubr.f32.mxu0 0.0
        %2231 = vmatmul.mubr.f32.gmra.mrb[0].mxu0 %v2071
        %v2232 = vpop.f32.mrb[0].mxu0
        %v2233 = vadd.f32 %v2068, %v2232
        %v2234 = vpop.f32.mrb[0].mxu0
        %2235 = vmatprep.mubr.f32.mxu0 0.0
        %2236 = vmatmul.mubr.f32.gmra.mrb[0].mxu0 %v2074
        %v2237 = vpop.f32.mrb[0].mxu0
        %v2238 = vadd.f32 %v2068, %v2237
        %v2239 = vpop.f32.mrb[0].mxu0
        %2240 = vmatprep.mubr.f32.mxu0 0.0
        %2241 = vmatmul.mubr.f32.gmra.mrb[0].mxu0 %v2077
        %v2242 = vpop.f32.mrb[0].mxu0
        %v2243 = vadd.f32 %v2068, %v2242
        %v2244 = vpop.f32.mrb[0].mxu0
        %2245 = vmatprep.mubr.f32.mxu0 0.0
        %2246 = vmatmul.mubr.f32.gmra.mrb[0].mxu0 %v2080
        %v2247 = vpop.f32.mrb[0].mxu0
        %v2248 = vadd.f32 %v2068, %v2247
        %v2249 = vpop.f32.mrb[0].mxu0
        %2250 = vmatprep.mubr.f32.mxu0 0.0
        %2251 = vmatmul.mubr.f32.gmra.mrb[0].mxu0 %v2083
        %v2252 = vpop.f32.mrb[0].mxu0
        %v2253 = vadd.f32 %v2068, %v2252
        %v2254 = vpop.f32.mrb[0].mxu0
        %2255 = vmatprep.mubr.f32.mxu0 0.0
        %2256 = vmatmul.mubr.f32.gmra.mrb[0].mxu0 %v2086
        %v2257 = vpop.f32.mrb[0].mxu0
        %v2258 = vadd.f32 %v2068, %v2257
        %v2259 = vpop.f32.mrb[0].mxu0
        %2260 = vmatprep.mubr.f32.mxu0 0.0
        %2261 = vmatmul.mubr.f32.gmra.mrb[0].mxu0 %v2089
        %v2262 = vpop.f32.mrb[0].mxu0
        %v2263 = vadd.f32 %v2068, %v2262
        %v2264 = vpop.f32.mrb[0].mxu0
        %2265 = vmatprep.mubr.f32.mxu0 0.0
        %2266 = vmatmul.mubr.f32.gmra.mrb[0].mxu0 %v2092
        %v2267 = vpop.f32.mrb[0].mxu0
        %v2268 = vadd.f32 %v2068, %v2267
        %v2269 = vpop.f32.mrb[0].mxu0
        %2270 = vmatprep.mubr.f32.mxu0 0.0
        %2271 = vmatmul.mubr.f32.gmra.mrb[0].mxu0 %v2095
        %v2272 = vpop.f32.mrb[0].mxu0
        %v2273 = vadd.f32 %v2068, %v2272
        %v2274 = vpop.f32.mrb[0].mxu0
        %2275 = vmatprep.mubr.f32.mxu0 0.0
        %2276 = vmatmul.mubr.f32.gmra.mrb[0].mxu0 %v2098
        %v2277 = vpop.f32.mrb[0].mxu0
        %v2278 = vadd.f32 %v2068, %v2277
        %v2279 = vpop.f32.mrb[0].mxu0
        %2280 = vmatprep.mubr.f32.mxu0 0.0
        %2281 = vmatmul.mubr.f32.gmra.mrb[0].mxu0 %v2101
        %v2282 = vpop.f32.mrb[0].mxu0
        %v2283 = vadd.f32 %v2068, %v2282
        %v2284 = vpop.f32.mrb[0].mxu0
        %2285 = vmatprep.mubr.f32.mxu0 0.0
        %2286 = vmatmul.mubr.f32.gmra.mrb[0].mxu0 %v2104
        %v2287 = vpop.f32.mrb[0].mxu0
        %v2288 = vadd.f32 %v2068, %v2287
        %v2289 = vpop.f32.mrb[0].mxu0
        %2290 = vmatprep.mubr.f32.mxu0 0.0
        %2291 = vmatmul.mubr.f32.gmra.mrb[0].mxu0 %v2107
        %v2292 = vpop.f32.mrb[0].mxu0
        %v2293 = vadd.f32 %v2068, %v2292
        %v2294 = vpop.f32.mrb[0].mxu0
        %2295 = vmatprep.mubr.f32.mxu0 0.0
        %2296 = vmatmul.mubr.f32.gmra.mrb[0].mxu0 %v2110
        %v2297 = vpop.f32.mrb[0].mxu0
        %v2298 = vadd.f32 %v2068, %v2297
        %v2299 = vpop.f32.mrb[0].mxu0
        %2300 = vmatprep.mubr.f32.mxu0 0.0
        %2301 = vmatmul.mubr.f32.gmra.mrb[0].mxu0 %v2113
        %v2302 = vpop.f32.mrb[0].mxu0
        %v2303 = vadd.f32 %v2068, %v2302
        %v2304 = vpop.f32.mrb[0].mxu0
        %2305 = vmatprep.mubr.f32.mxu0 0.0
        %2306 = vmatmul.mubr.f32.gmra.mrb[0].mxu0 %v2116
        %v2307 = vpop.f32.mrb[0].mxu0
        %v2308 = vadd.f32 %v2068, %v2307
        %v2309 = vpop.f32.mrb[0].mxu0
        %2310 = vmatprep.mubr.f32.mxu0 0.0
        %2311 = vmatmul.mubr.f32.gmra.mrb[0].mxu0 %v2119
        %v2312 = vpop.f32.mrb[0].mxu0
        %v2313 = vadd.f32 %v2068, %v2312
        %v2314 = vpop.f32.mrb[0].mxu0
        %2315 = vmatprep.mubr.f32.mxu0 0.0
        %2316 = vmatmul.mubr.f32.gmra.mrb[0].mxu0 %v2122
        %v2317 = vpop.f32.mrb[0].mxu0
        %v2318 = vadd.f32 %v2068, %v2317
        %v2319 = vpop.f32.mrb[0].mxu0
        %2320 = vmatprep.mubr.f32.mxu0 0.0
        %2321 = vmatmul.mubr.f32.gmra.mrb[0].mxu0 %v2125
        %v2322 = vpop.f32.mrb[0].mxu0
        %v2323 = vadd.f32 %v2068, %v2322
        %v2324 = vpop.f32.mrb[0].mxu0
        %2325 = vmatprep.mubr.f32.mxu0 0.0
        %2326 = vmatmul.mubr.f32.gmra.mrb[0].mxu0 %v2128
        %v2327 = vpop.f32.mrb[0].mxu0
        %v2328 = vadd.f32 %v2068, %v2327
        %v2329 = vpop.f32.mrb[0].mxu0
        %2330 = vmatprep.mubr.f32.mxu0 0.0
        %2331 = vmatmul.mubr.f32.gmra.mrb[0].mxu0 %v2131
        %v2332 = vpop.f32.mrb[0].mxu0
        %v2333 = vadd.f32 %v2068, %v2332
        %v2334 = vpop.f32.mrb[0].mxu0
        %2335 = vmatprep.mubr.f32.mxu0 0.0
        %2336 = vmatmul.mubr.f32.gmra.mrb[0].mxu0 %v2134
        %v2337 = vpop.f32.mrb[0].mxu0
        %v2338 = vadd.f32 %v2068, %v2337
        %v2339 = vpop.f32.mrb[0].mxu0
        %2340 = vmatprep.mubr.f32.mxu0 0.0
        %2341 = vmatmul.mubr.f32.gmra.mrb[0].mxu0 %v2137
        %v2342 = vpop.f32.mrb[0].mxu0
        %v2343 = vadd.f32 %v2068, %v2342
        %v2344 = vpop.f32.mrb[0].mxu0
        %2345 = vmatprep.mubr.f32.mxu0 0.0
        %2346 = vmatmul.mubr.f32.gmra.mrb[0].mxu0 %v2140
        %v2347 = vpop.f32.mrb[0].mxu0
        %v2348 = vadd.f32 %v2068, %v2347
        %v2349 = vpop.f32.mrb[0].mxu0
        %2350 = vmatprep.mubr.f32.mxu0 0.0
        %2351 = vmatmul.mubr.f32.gmra.mrb[0].mxu0 %v2143
        %v2352 = vpop.f32.mrb[0].mxu0
        %v2353 = vadd.f32 %v2068, %v2352
        %v2354 = vpop.f32.mrb[0].mxu0
        %2355 = vmatprep.mubr.f32.mxu0 0.0
        %2356 = vmatmul.mubr.f32.gmra.mrb[0].mxu0 %v2146
        %v2357 = vpop.f32.mrb[0].mxu0
        %v2358 = vadd.f32 %v2068, %v2357
        %v2359 = vpop.f32.mrb[0].mxu0
        %2360 = vmatprep.mubr.f32.mxu0 0.0
        %2361 = vmatmul.mubr.f32.gmra.mrb[0].mxu0 %v2149
        %v2362 = vpop.f32.mrb[0].mxu0
        %v2363 = vadd.f32 %v2068, %v2362
        %v2364 = vpop.f32.mrb[0].mxu0
        %2365 = vmatprep.mubr.f32.mxu0 0.0
        %2366 = vmatmul.mubr.f32.gmra.mrb[0].mxu0 %v2152
        %v2367 = vpop.f32.mrb[0].mxu0
        %v2368 = vadd.f32 %v2068, %v2367
        %v2369 = vpop.f32.mrb[0].mxu0
        %2370 = vmatprep.mubr.f32.mxu0 0.0
        %2371 = vmatmul.mubr.f32.gmra.mrb[0].mxu0 %v2155
        %v2372 = vpop.f32.mrb[0].mxu0
        %v2373 = vadd.f32 %v2068, %v2372
        %v2374 = vpop.f32.mrb[0].mxu0
        %2375 = vmatprep.mubr.f32.mxu0 0.0
        %2376 = vmatmul.mubr.f32.gmra.mrb[0].mxu0 %v2158
        %v2377 = vpop.f32.mrb[0].mxu0
        %v2378 = vadd.f32 %v2068, %v2377
        %v2379 = vpop.f32.mrb[0].mxu0
        %2380 = vmatprep.mubr.f32.mxu0 0.0
        %2381 = vmatmul.mubr.f32.gmra.mrb[0].mxu0 %v2161
        %v2382 = vpop.f32.mrb[0].mxu0
        %v2383 = vadd.f32 %v2068, %v2382
        %v2384 = vpop.f32.mrb[0].mxu0
        %2385 = vmatprep.mubr.f32.mxu0 0.0
        %2386 = vmatmul.mubr.f32.gmra.mrb[0].mxu0 %v2164
        %v2387 = vpop.f32.mrb[0].mxu0
        %v2388 = vadd.f32 %v2068, %v2387
        %v2389 = vpop.f32.mrb[0].mxu0
        %2390 = vdwg.mxu0
        %v2391 = vadd.f32 %v2032, %v2233
        %v2392 = vadd.f32 %v2033, %v2238
        %v2393 = vadd.f32 %v2034, %v2243
        %v2394 = vadd.f32 %v2035, %v2248
        %v2395 = vadd.f32 %v2036, %v2253
        %v2396 = vadd.f32 %v2037, %v2258
        %v2397 = vadd.f32 %v2038, %v2263
        %v2398 = vadd.f32 %v2039, %v2268
        %v2399 = vadd.f32 %v2040, %v2273
        %v2400 = vadd.f32 %v2041, %v2278
        %v2401 = vadd.f32 %v2042, %v2283
        %v2402 = vadd.f32 %v2043, %v2288
        %v2403 = vadd.f32 %v2044, %v2293
        %v2404 = vadd.f32 %v2045, %v2298
        %v2405 = vadd.f32 %v2046, %v2303
        %v2406 = vadd.f32 %v2047, %v2308
        %v2407 = vadd.f32 %v2048, %v2313
        %v2408 = vadd.f32 %v2049, %v2318
        %v2409 = vadd.f32 %v2050, %v2323
        %v2410 = vadd.f32 %v2051, %v2328
        %v2411 = vadd.f32 %v2052, %v2333
        %v2412 = vadd.f32 %v2053, %v2338
        %v2413 = vadd.f32 %v2054, %v2343
        %v2414 = vadd.f32 %v2055, %v2348
        %v2415 = vadd.f32 %v2056, %v2353
        %v2416 = vadd.f32 %v2057, %v2358
        %v2417 = vadd.f32 %v2058, %v2363
        %v2418 = vadd.f32 %v2059, %v2368
        %v2419 = vadd.f32 %v2060, %v2373
        %v2420 = vadd.f32 %v2061, %v2378
        %v2421 = vadd.f32 %v2062, %v2383
        %v2422 = vadd.f32 %v2063, %v2388
        %v2423 = vmul.f32 %v2391, 0.5
        %v2424 = vmul.f32 %v2392, 0.5
        %v2425 = vmul.f32 %v2393, 0.5
        %v2426 = vmul.f32 %v2394, 0.5
        %v2427 = vmul.f32 %v2395, 0.5
        %v2428 = vmul.f32 %v2396, 0.5
        %v2429 = vmul.f32 %v2397, 0.5
        %v2430 = vmul.f32 %v2398, 0.5
        %v2431 = vmul.f32 %v2399, 0.5
        %v2432 = vmul.f32 %v2400, 0.5
        %v2433 = vmul.f32 %v2401, 0.5
        %v2434 = vmul.f32 %v2402, 0.5
        %v2435 = vmul.f32 %v2403, 0.5
        %v2436 = vmul.f32 %v2404, 0.5
        %v2437 = vmul.f32 %v2405, 0.5
        %v2438 = vmul.f32 %v2406, 0.5
        %v2439 = vmul.f32 %v2407, 0.5
        %v2440 = vmul.f32 %v2408, 0.5
        %v2441 = vmul.f32 %v2409, 0.5
        %v2442 = vmul.f32 %v2410, 0.5
        %v2443 = vmul.f32 %v2411, 0.5
        %v2444 = vmul.f32 %v2412, 0.5
        %v2445 = vmul.f32 %v2413, 0.5
        %v2446 = vmul.f32 %v2414, 0.5
        %v2447 = vmul.f32 %v2415, 0.5
        %v2448 = vmul.f32 %v2416, 0.5
        %v2449 = vmul.f32 %v2417, 0.5
        %v2450 = vmul.f32 %v2418, 0.5
        %v2451 = vmul.f32 %v2419, 0.5
        %v2452 = vmul.f32 %v2420, 0.5
        %v2453 = vmul.f32 %v2421, 0.5
        %v2454 = vmul.f32 %v2422, 0.5
        %2455 = vxpose.xlu0.b32.start [1/16] %v2423, 128
        %2456 = vxpose.xlu0.b32.cont [2/16] %v2424, 128
        %2457 = vxpose.xlu0.b32.cont [3/16] %v2425, 128
        %2458 = vxpose.xlu0.b32.cont [4/16] %v2426, 128
        %2459 = vxpose.xlu0.b32.cont [5/16] %v2427, 128
        %2460 = vxpose.xlu0.b32.cont [6/16] %v2428, 128
        %2461 = vxpose.xlu0.b32.cont [7/16] %v2429, 128
        %2462 = vxpose.xlu0.b32.cont [8/16] %v2430, 128
        %2463 = vxpose.xlu0.b32.cont [9/16] %v2431, 128
        %2464 = vxpose.xlu0.b32.cont [10/16] %v2432, 128
        %2465 = vxpose.xlu0.b32.cont [11/16] %v2433, 128
        %2466 = vxpose.xlu0.b32.cont [12/16] %v2434, 128
        %2467 = vxpose.xlu0.b32.cont [13/16] %v2435, 128
        %2468 = vxpose.xlu0.b32.cont [14/16] %v2436, 128
        %2469 = vxpose.xlu0.b32.cont [15/16] %v2437, 128
        %2470 = vxpose.xlu0.b32.end [16/16] %v2438, 128
        %v2471 = vpop.trf.xlu0
        %v2472 = vpop.trf.xlu0
        %v2473 = vpop.trf.xlu0
        %v2474 = vpop.trf.xlu0
        %v2475 = vpop.trf.xlu0
        %v2476 = vpop.trf.xlu0
        %v2477 = vpop.trf.xlu0
        %v2478 = vpop.trf.xlu0
        %v2479 = vpop.trf.xlu0
        %v2480 = vpop.trf.xlu0
        %v2481 = vpop.trf.xlu0
        %v2482 = vpop.trf.xlu0
        %v2483 = vpop.trf.xlu0
        %v2484 = vpop.trf.xlu0
        %v2485 = vpop.trf.xlu0
        %v2486 = vpop.trf.xlu0
        %2487 = vst [vmem:[%s373] sm:$0xff] %v2471
        %2488 = vxpose.xlu0.b32.start [1/16] %v2439, 128
        %2489 = vxpose.xlu0.b32.cont [2/16] %v2440, 128
        %2490 = vxpose.xlu0.b32.cont [3/16] %v2441, 128
        %2491 = vxpose.xlu0.b32.cont [4/16] %v2442, 128
        %2492 = vxpose.xlu0.b32.cont [5/16] %v2443, 128
        %2493 = vxpose.xlu0.b32.cont [6/16] %v2444, 128
        %2494 = vxpose.xlu0.b32.cont [7/16] %v2445, 128
        %2495 = vxpose.xlu0.b32.cont [8/16] %v2446, 128
        %2496 = vxpose.xlu0.b32.cont [9/16] %v2447, 128
        %2497 = vxpose.xlu0.b32.cont [10/16] %v2448, 128
        %2498 = vxpose.xlu0.b32.cont [11/16] %v2449, 128
        %2499 = vxpose.xlu0.b32.cont [12/16] %v2450, 128
        %2500 = vxpose.xlu0.b32.cont [13/16] %v2451, 128
        %2501 = vxpose.xlu0.b32.cont [14/16] %v2452, 128
        %2502 = vxpose.xlu0.b32.cont [15/16] %v2453, 128
        %2503 = vxpose.xlu0.b32.end [16/16] %v2454, 128
        %v2504 = vpop.trf.xlu0
        %v2505 = vpop.trf.xlu0
        %v2506 = vpop.trf.xlu0
        %v2507 = vpop.trf.xlu0
        %v2508 = vpop.trf.xlu0
        %v2509 = vpop.trf.xlu0
        %v2510 = vpop.trf.xlu0
        %v2511 = vpop.trf.xlu0
        %v2512 = vpop.trf.xlu0
        %v2513 = vpop.trf.xlu0
        %v2514 = vpop.trf.xlu0
        %v2515 = vpop.trf.xlu0
        %v2516 = vpop.trf.xlu0
        %v2517 = vpop.trf.xlu0
        %v2518 = vpop.trf.xlu0
        %v2519 = vpop.trf.xlu0
        %s2520 = scalar_lea.vmem %s373, 8 [#allocation2]
        %2521 = vst [vmem:[%s2520] sm:$0xff] %v2504
        %s2522 = sand.u32 %s252, 1
        %s2523 = scalar_lea.sflag [#allocation3], %s2522
        %s2524 = sand.u32 %s252, 1
        %s2525 = smul.addr %s2524, 16
        %s2526 = scalar_lea.vmem [#allocation2], %s2525
        // Predicated region
        $region61: #{tpu_custom_call.1} parent=59 // pred_check
          %p2527 = pneg %p262
        $region62: #{tpu_custom_call.1} parent=59 // pred_check_branch
          %2529 = sbr.rel (%p2527) target = $region64
        $region63: #{tpu_custom_call.1} parent=59 // pred_region
          %s2530 = smul.u32 2, %s24
          %s2532 = ssub.s32 256, 256
          %2533 = vsyncadd %s2523, %s2532
          %s2534 = smul.addr %s2530, 128
          %s2535 = scalar_lea.hbm %s10, %s2534
          %s2536 = sshll.u32 %s2526, 4
          %s2537 = int_to_ptr.vmem [resolvable:$true] %s2536
          %2542 = dma.vmem_to_hbm [thread:$0]  %s2537, 256, %s2535, %s2523, 128, 128, 8
        $region64: #{tpu_custom_call.1} parent=59 // pred_fallthru
          _
      $region60: #{tpu_custom_call.1} parent=5 // pred_fallthru
        _
      %p2543 = scmp.le.s32.totalorder 2, %s19
      // Predicated region
      $region65: #{tpu_custom_call.1} parent=5 // pred_check
        %p2544 = pneg %p2543
      $region66: #{tpu_custom_call.1} parent=5 // pred_check_branch
        %2546 = sbr.rel (%p2544) target = $region68
      $region67: #{tpu_custom_call.1} parent=5 // pred_region
        %s2547 = ssub.s32 %s19, 2
        // Predicated region
        $region69: #{tpu_custom_call.1} parent=67 // pred_check
          %p2548 = pneg %p268
        $region70: #{tpu_custom_call.1} parent=67 // pred_check_branch
          %2550 = sbr.rel (%p2548) target = $region72
        $region71: #{tpu_custom_call.1} parent=67 // pred_region
          %s2551 = sand.u32 %s253, 1
          %s2552 = scalar_lea.sflag [#allocation3], %s2551
          %s2553 = sand.u32 %s253, 1
          %s2554 = smul.addr %s2553, 16
          %s2555 = scalar_lea.vmem [#allocation2], %s2554
          %2556 = dma.done %s2552, 256
        $region72: #{tpu_custom_call.1} parent=67 // pred_fallthru
          _
      $region68: #{tpu_custom_call.1} parent=5 // pred_fallthru
        _
    $region6: #{tpu_custom_call.1} parent=1 // loop_footer
      %s23 = sadd.s32 1, %s19
    $region7: #{tpu_custom_call.1} parent=1 // loop_footer_branch
      %18 = sbr.rel target = $region3
    $region8: #{tpu_custom_call.1} parent=1 // loop_exit
      _
    %2557 = vsyncpa [#allocation3], 1
    %s2558 = scalar_lea.sflag [#allocation3], 1
    %2559 = vsyncpa %s2558, 1

</llo_original>
